<compile_context>
chip_gen: v6e
topology: v6e:2x2x1
jax: 0.10.0
libtpu: 0.0.40
codegen_flags: <defaults>
</compile_context>

<pallas_src>
import numpy as np
import jax
import jax.numpy as jnp
from jax.experimental import pallas as pl
from jax.experimental.pallas import tpu as pltpu

# ---- scaled-down model dimensions (stand-ins for 2048 / 512 of the original) ----
FEAT     = 256   # "2048" resnet feature dim
HID      = 64    # LSTM hidden size
FC_HID   = 64    # "512" hidden of the fc head
NCLS     = 8     # num_classes
NCLS_PAD = 128   # lane-dense padded logits width (sliced back to NCLS in the wrapper)
BN_EPS   = 1e-5
D_CAT    = FEAT + HID                 # concat(x1_last, h_last) width

assert FEAT & (FEAT - 1) == 0, "FEAT must be a power of two (shift-based picker generation)"
FEAT_SHIFT = FEAT.bit_length() - 1


def _check_pool_windows(d_in, d_out):
    """AdaptiveMaxPool1d windows must have width <= 2 for the two-picker max trick."""
    for i in range(d_out):
        s = (i * d_in) // d_out
        e = -((-(i + 1) * d_in) // d_out)
        assert e - s <= 2, "adaptive-pool window wider than 2: picker trick needs extension"


_check_pool_windows(D_CAT, FEAT)


# ----------------------------------------------------------------------------- weight folding
def fold_params(params, C, HW):
    """One-time host-side weight folding; reuse the result across forward calls."""
    # BatchNorm1d (eval) folded into fc1
    scale = params["gamma"] * jax.lax.rsqrt(params["var"] + BN_EPS)          # (1, FC_HID)
    w1_eff = params["w1"] * scale                                            # (FEAT, FC_HID)
    b1_eff = (params["b1"] - params["mean"]) * scale + params["beta"]        # (1, FC_HID)
    # lane-dense padded classifier (unmasked 128-lane store in-kernel)
    w2_pad = jnp.zeros((FC_HID, NCLS_PAD), jnp.float32).at[:, :NCLS].set(params["w2"])
    b2_pad = jnp.zeros((1, NCLS_PAD), jnp.float32).at[:, :NCLS].set(params["b2"])
    # tiny (C*HW, C) spatial-averaging matrix: GAP as a 4 KB matmul instead of a rank-C
    # repeat-folded (C*HW, FEAT) weight (which cannot scale to real shapes / v7x VMEM).
    avg = jnp.repeat(jnp.eye(C, dtype=jnp.float32), HW, axis=0) / float(HW)  # (C*HW, C)
    return {
        "avg":    avg,
        "wf":     params["wf"].astype(jnp.bfloat16),     # bf16 weight storage -> half the DMA
        "bf":     params["bf"],
        "w_ih":   params["w_ih"].astype(jnp.bfloat16),
        "w_hh":   params["w_hh"].astype(jnp.bfloat16),
        "b_lstm": params["b_lstm"],
        "w1":     w1_eff,                                # kept f32 (folded with BN)
        "b1":     b1_eff,
        "w2":     w2_pad.astype(jnp.bfloat16),
        "b2":     b2_pad,
    }


# ----------------------------------------------------------------------------- forward
def group_activity_forward(x, folded):
    B, BB, T, C, H, W = x.shape
    HW = H * W
    N2 = B * BB
    N2P = max(8, ((N2 + 7) // 8) * 8)      # pad rows-per-timestep to the (8,·) sublane tile

    # time-major / bbox-major / batch-minor rows; zero-pad each timestep block to N2P rows so
    # every per-timestep slice inside the recurrence is sublane-tile aligned.
    xr = jnp.transpose(x, (2, 1, 0, 3, 4, 5)).reshape(T, N2, C * HW)
    xr = jnp.pad(xr, ((0, 0), (0, N2P - N2), (0, 0)))
    x2d = xr.reshape(T * N2P, C * HW)

    def kernel(x2d_ref, avg_ref, wf_ref, bf_ref, wih_ref, whh_ref, blstm_ref,
               w1_ref, b1_ref, w2_ref, b2_ref, out_ref):
        f32 = jnp.float32

        # ---- backbone stand-in: spatial GAP (tiny averaging matmul) + linear projection --
        pooled_c = jnp.dot(x2d_ref[...], avg_ref[...], preferred_element_type=f32)   # (R, C)
        feats = jnp.dot(pooled_c, wf_ref[...], preferred_element_type=f32) + bf_ref[...]

        # ---- LSTM input projection hoisted out of the time recurrence --------------------
        gin = jnp.dot(feats, wih_ref[...], preferred_element_type=f32) + blstm_ref[...]

        # gate lanes (PyTorch order i, f, g, o): tanh on chunk 2, sigmoid elsewhere
        lane = jax.lax.broadcasted_iota(jnp.int32, (N2P, 4 * HID), 1)
        tanh_mask = (lane >= 2 * HID) & (lane < 3 * HID)

        whh = whh_ref[...]
        h = jnp.zeros((N2P, HID), f32)
        c = jnp.zeros((N2P, HID), f32)
        # TODO(synk): lax.fori_loop(..., unroll=True) once T grows beyond toy sizes.
        for t in range(T):
            g = gin[t * N2P:(t + 1) * N2P, :] + jnp.dot(h, whh, preferred_element_type=f32)
            # single EUP tanh pass: sigmoid(x) = 0.5 * tanh(0.5 * x) + 0.5
            th = jnp.tanh(jnp.where(tanh_mask, g, 0.5 * g))
            act = jnp.where(tanh_mask, th, 0.5 * th + 0.5)
            i_g = act[:, 0 * HID:1 * HID]
            f_g = act[:, 1 * HID:2 * HID]
            g_g = act[:, 2 * HID:3 * HID]
            o_g = act[:, 3 * HID:4 * HID]
            c = f_g * c + i_g * g_g
            h = o_g * jnp.tanh(c)

        # ---- concat(x1[:, -1], x2[:, -1]) + max over bounding boxes ----------------------
        # rows within a timestep block are bbox-major / batch-minor; padded rows (>= N2)
        # are never read, so no -inf padding is needed for this max.
        x1_last = feats[(T - 1) * N2P:T * N2P, :]        # (N2P, FEAT)
        xmax_f = x1_last[0:B, :]
        hmax = h[0:B, :]
        for bb in range(1, BB):
            xmax_f = jnp.maximum(xmax_f, x1_last[bb * B:(bb + 1) * B, :])
            hmax = jnp.maximum(hmax, h[bb * B:(bb + 1) * B, :])

        # ---- AdaptiveMaxPool (BB, D) -> (1, FEAT): width<=2 windows -----------------------
        # pooled[:, i] = max(xm[:, s_i], xm[:, e_i - 1]).  One-hot pickers are generated
        # in-kernel from iota comparisons (zero HBM bytes), fused into one (., 2*FEAT)
        # product (2 MXU pushes), and split across the FEAT / HID halves so no D_CAT-wide
        # lane concat is materialized.  The max then runs on the two 256-lane halves.
        j = jax.lax.broadcasted_iota(jnp.int32, (1, 2 * FEAT), 1)
        i = j & (FEAT - 1)                                       # j mod FEAT (output position)
        s = (i * D_CAT) >> FEAT_SHIFT                            # floor(i * D / FEAT)
        e1 = (((i + 1) * D_CAT + FEAT - 1) >> FEAT_SHIFT) - 1    # ceil((i+1)*D/FEAT) - 1
        tgt = jnp.where(j >= FEAT, e1, s)                        # (1, 2*FEAT) source index

        def picker(nrows, row_off):
            d = jax.lax.broadcasted_iota(jnp.int32, (nrows, 1), 0) + row_off
            return (d == tgt).astype(f32)                        # (nrows, 2*FEAT)

        cand = (jnp.dot(xmax_f, picker(FEAT, 0), preferred_element_type=f32)
                + jnp.dot(hmax, picker(HID, FEAT), preferred_element_type=f32))   # (B, 2*FEAT)
        pooled = jnp.maximum(cand[:, :FEAT], cand[:, FEAT:])                      # (B, FEAT)

        # ---- fc head: Linear (+BN folded) + ReLU (+Dropout == identity in eval) + Linear --
        h1 = jnp.maximum(
            jnp.dot(pooled, w1_ref[...], preferred_element_type=f32) + b1_ref[...], 0.0)
        out_ref[...] = (jnp.dot(h1, w2_ref[...], preferred_element_type=f32)
                        + b2_ref[...])                                            # (B, NCLS_PAD)

    vmem = lambda: pl.BlockSpec(memory_space=pltpu.MemorySpace.VMEM)
    out_pad = pl.pallas_call(
        kernel,
        out_shape=jax.ShapeDtypeStruct((B, NCLS_PAD), jnp.float32),
        in_specs=[vmem() for _ in range(11)],
        out_specs=vmem(),
    )(x2d, folded["avg"], folded["wf"], folded["bf"], folded["w_ih"], folded["w_hh"],
      folded["b_lstm"], folded["w1"], folded["b1"], folded["w2"], folded["b2"])

    return out_pad[:, :NCLS]


# ----------------------------------------------------------------------------- NumPy reference
def reference_forward(x, params):
    """Unfused, unfolded NumPy reference matching the PyTorch forward semantics."""
    x = np.asarray(x, np.float32)
    p = {k: np.asarray(v, np.float32) for k, v in params.items()}

    def sigmoid(z):
        return 1.0 / (1.0 + np.exp(-z))

    B, BB, T, C, H, W = x.shape
    xf = x.reshape(B * BB * T, C, H * W)
    feats = xf.mean(-1) @ p["wf"] + p["bf"]
    x1 = feats.reshape(B * BB, T, FEAT)

    h = np.zeros((B * BB, HID), np.float32)
    c = np.zeros((B * BB, HID), np.float32)
    for t in range(T):
        g = x1[:, t] @ p["w_ih"] + h @ p["w_hh"] + p["b_lstm"]
        i_g = sigmoid(g[:, :HID]); f_g = sigmoid(g[:, HID:2 * HID])
        g_g = np.tanh(g[:, 2 * HID:3 * HID]); o_g = sigmoid(g[:, 3 * HID:])
        c = f_g * c + i_g * g_g
        h = o_g * np.tanh(c)

    cat = np.concatenate([x1[:, -1], h], axis=1).reshape(B, BB, D_CAT)
    xm = cat.max(axis=1)                                            # max over bounding boxes
    pooled = np.zeros((B, FEAT), np.float32)
    for i in range(FEAT):                                           # AdaptiveMaxPool windows
        s = (i * D_CAT) // FEAT
        e = -((-(i + 1) * D_CAT) // FEAT)
        pooled[:, i] = xm[:, s:e].max(axis=1)

    h1 = pooled @ p["w1"] + p["b1"]
    h1 = (h1 - p["mean"]) / np.sqrt(p["var"] + BN_EPS) * p["gamma"] + p["beta"]
    h1 = np.maximum(h1, 0.0)
    return h1 @ p["w2"] + p["b2"]


# ----------------------------------------------------------------------------- main
if __name__ == "__main__":
    # small shapes consistent with the module's 6-D input (B, BB, T, C, H, W)
    B, BB, T, C, H, W = 2, 3, 4, 4, 8, 8

    key = jax.random.PRNGKey(0)
    ks = jax.random.split(key, 14)
    sc = 0.05

    def bf16_grid(a):
        # snap test weights to bf16-representable values so the kernel's bf16 weight
        # storage (DMA-byte optimization) is bit-exact w.r.t. the f32 reference.
        return jnp.asarray(jnp.asarray(a, jnp.bfloat16), jnp.float32)

    params = {
        "wf":     bf16_grid(sc * jax.random.normal(ks[0], (C, FEAT), jnp.float32)),
        "bf":     sc * jax.random.normal(ks[1], (1, FEAT), jnp.float32),
        "w_ih":   bf16_grid(sc * jax.random.normal(ks[2], (FEAT, 4 * HID), jnp.float32)),
        "w_hh":   bf16_grid(sc * jax.random.normal(ks[3], (HID, 4 * HID), jnp.float32)),
        "b_lstm": sc * jax.random.normal(ks[4], (1, 4 * HID), jnp.float32),
        "w1":     sc * jax.random.normal(ks[5], (FEAT, FC_HID), jnp.float32),
        "b1":     sc * jax.random.normal(ks[6], (1, FC_HID), jnp.float32),
        # non-trivial BatchNorm1d running stats / affine (eval mode), to exercise the fold
        "gamma":  1.0 + 0.1 * jax.random.normal(ks[7], (1, FC_HID), jnp.float32),
        "beta":   0.1 * jax.random.normal(ks[8], (1, FC_HID), jnp.float32),
        "mean":   0.1 * jax.random.normal(ks[9], (1, FC_HID), jnp.float32),
        "var":    1.0 + 0.5 * jax.random.uniform(ks[10], (1, FC_HID), jnp.float32),
        "w2":     bf16_grid(sc * jax.random.normal(ks[11], (FC_HID, NCLS), jnp.float32)),
        "b2":     sc * jax.random.normal(ks[12], (1, NCLS), jnp.float32),
    }

    x = jax.random.normal(ks[13], (B, BB, T, C, H, W), jnp.float32)

    folded = fold_params(params, C, H * W)          # fold once; reuse across calls
    forward = jax.jit(group_activity_forward)

    out = jax.block_until_ready(forward(x, folded))

    ref = reference_forward(x, params)
    assert out.shape == (B, NCLS), out.shape
    err = float(np.max(np.abs(np.asarray(out) - ref)))
    assert np.allclose(np.asarray(out), ref, rtol=1e-3, atol=1e-3), f"max abs err {err}"

    print("KERNEL_OK")
</pallas_src>

<mosaic_0001>
module attributes {stable_mosaic.version = 11 : i64} {
  func.func @kernel(%arg0: memref<32x256xf32, #tpu.memory_space<vmem>>, %arg1: memref<256x4xf32, #tpu.memory_space<vmem>>, %arg2: memref<4x256xbf16, #tpu.memory_space<vmem>>, %arg3: memref<1x256xf32, #tpu.memory_space<vmem>>, %arg4: memref<256x256xbf16, #tpu.memory_space<vmem>>, %arg5: memref<64x256xbf16, #tpu.memory_space<vmem>>, %arg6: memref<1x256xf32, #tpu.memory_space<vmem>>, %arg7: memref<256x64xf32, #tpu.memory_space<vmem>>, %arg8: memref<1x64xf32, #tpu.memory_space<vmem>>, %arg9: memref<64x128xbf16, #tpu.memory_space<vmem>>, %arg10: memref<1x128xf32, #tpu.memory_space<vmem>>, %arg11: memref<2x128xf32, #tpu.memory_space<vmem>>) attributes {dimension_semantics = [], scalar_prefetch = 0 : i64, scratch_operands = 0 : i64, tpu.core_type = #tpu.core_type<tc>} {
    %c0 = arith.constant 0 : index
    %c0_0 = arith.constant 0 : index
    %0 = vector.load %arg0[%c0, %c0_0] : memref<32x256xf32, #tpu.memory_space<vmem>>, vector<32x256xf32>
    %c0_1 = arith.constant 0 : index
    %c0_2 = arith.constant 0 : index
    %1 = vector.load %arg1[%c0_1, %c0_2] : memref<256x4xf32, #tpu.memory_space<vmem>>, vector<256x4xf32>
    %cst = arith.constant dense<0.000000e+00> : vector<32x4xf32>
    %2 = tpu.matmul %0, %1, %cst {dimension_numbers = #tpu.dot_dimension_numbers<[1], [0], [0], [1], [0, 0, 1, 1], [], []>} : vector<32x256xf32>, vector<256x4xf32>, vector<32x4xf32> -> vector<32x4xf32>
    %c0_3 = arith.constant 0 : index
    %c0_4 = arith.constant 0 : index
    %3 = vector.load %arg2[%c0_3, %c0_4] : memref<4x256xbf16, #tpu.memory_space<vmem>>, vector<4x256xbf16>
    %cst_5 = arith.constant dense<0.000000e+00> : vector<32x256xf32>
    %4 = tpu.matmul %2, %3, %cst_5 {dimension_numbers = #tpu.dot_dimension_numbers<[1], [0], [0], [1], [0, 0, 1, 1], [], []>} : vector<32x4xf32>, vector<4x256xbf16>, vector<32x256xf32> -> vector<32x256xf32>
    %c0_6 = arith.constant 0 : index
    %c0_7 = arith.constant 0 : index
    %5 = vector.load %arg3[%c0_6, %c0_7] : memref<1x256xf32, #tpu.memory_space<vmem>>, vector<1x256xf32>
    %6 = vector.broadcast %5 : vector<1x256xf32> to vector<32x256xf32>
    %7 = arith.addf %4, %6 : vector<32x256xf32>
    %c0_8 = arith.constant 0 : index
    %c0_9 = arith.constant 0 : index
    %8 = vector.load %arg4[%c0_8, %c0_9] : memref<256x256xbf16, #tpu.memory_space<vmem>>, vector<256x256xbf16>
    %cst_10 = arith.constant dense<0.000000e+00> : vector<32x256xf32>
    %9 = tpu.matmul %7, %8, %cst_10 {dimension_numbers = #tpu.dot_dimension_numbers<[1], [0], [0], [1], [0, 0, 1, 1], [], []>} : vector<32x256xf32>, vector<256x256xbf16>, vector<32x256xf32> -> vector<32x256xf32>
    %c0_11 = arith.constant 0 : index
    %c0_12 = arith.constant 0 : index
    %10 = vector.load %arg6[%c0_11, %c0_12] : memref<1x256xf32, #tpu.memory_space<vmem>>, vector<1x256xf32>
    %11 = vector.broadcast %10 : vector<1x256xf32> to vector<32x256xf32>
    %12 = arith.addf %9, %11 : vector<32x256xf32>
    %13 = tpu.iota {dimensions = array<i32: 1>} : vector<8x256xi32>
    %c128_i32 = arith.constant 128 : i32
    %14 = vector.broadcast %c128_i32 : i32 to vector<8x256xi32>
    %15 = arith.cmpi sge, %13, %14 : vector<8x256xi32>
    %c192_i32 = arith.constant 192 : i32
    %16 = vector.broadcast %c192_i32 : i32 to vector<8x256xi32>
    %17 = arith.cmpi slt, %13, %16 : vector<8x256xi32>
    %18 = arith.andi %15, %17 : vector<8x256xi1>
    %c0_13 = arith.constant 0 : index
    %c0_14 = arith.constant 0 : index
    %19 = vector.load %arg5[%c0_13, %c0_14] : memref<64x256xbf16, #tpu.memory_space<vmem>>, vector<64x256xbf16>
    %cst_15 = arith.constant 0.000000e+00 : f32
    %20 = vector.broadcast %cst_15 : f32 to vector<8x64xf32>
    %cst_16 = arith.constant 0.000000e+00 : f32
    %21 = vector.broadcast %cst_16 : f32 to vector<8x64xf32>
    %22 = vector.extract_strided_slice %12 {offsets = [0, 0], sizes = [8, 256], strides = [1, 1]} : vector<32x256xf32> to vector<8x256xf32>
    %cst_17 = arith.constant dense<0.000000e+00> : vector<8x256xf32>
    %23 = tpu.matmul %20, %19, %cst_17 {dimension_numbers = #tpu.dot_dimension_numbers<[1], [0], [0], [1], [0, 0, 1, 1], [], []>} : vector<8x64xf32>, vector<64x256xbf16>, vector<8x256xf32> -> vector<8x256xf32>
    %24 = arith.addf %22, %23 : vector<8x256xf32>
    %cst_18 = arith.constant 5.000000e-01 : f32
    %25 = vector.broadcast %cst_18 : f32 to vector<8x256xf32>
    %26 = arith.mulf %25, %24 : vector<8x256xf32>
    %27 = arith.select %18, %24, %26 : vector<8x256xi1>, vector<8x256xf32>
    %28 = math.tanh %27 : vector<8x256xf32>
    %cst_19 = arith.constant 5.000000e-01 : f32
    %29 = vector.broadcast %cst_19 : f32 to vector<8x256xf32>
    %30 = arith.mulf %29, %28 : vector<8x256xf32>
    %cst_20 = arith.constant 5.000000e-01 : f32
    %31 = vector.broadcast %cst_20 : f32 to vector<8x256xf32>
    %32 = arith.addf %30, %31 : vector<8x256xf32>
    %33 = arith.select %18, %28, %32 : vector<8x256xi1>, vector<8x256xf32>
    %34 = vector.extract_strided_slice %33 {offsets = [0, 0], sizes = [8, 64], strides = [1, 1]} : vector<8x256xf32> to vector<8x64xf32>
    %35 = vector.extract_strided_slice %33 {offsets = [0, 64], sizes = [8, 64], strides = [1, 1]} : vector<8x256xf32> to vector<8x64xf32>
    %36 = vector.extract_strided_slice %33 {offsets = [0, 128], sizes = [8, 64], strides = [1, 1]} : vector<8x256xf32> to vector<8x64xf32>
    %37 = vector.extract_strided_slice %33 {offsets = [0, 192], sizes = [8, 64], strides = [1, 1]} : vector<8x256xf32> to vector<8x64xf32>
    %38 = arith.mulf %35, %21 : vector<8x64xf32>
    %39 = arith.mulf %34, %36 : vector<8x64xf32>
    %40 = arith.addf %38, %39 : vector<8x64xf32>
    %41 = math.tanh %40 : vector<8x64xf32>
    %42 = arith.mulf %37, %41 : vector<8x64xf32>
    %43 = vector.extract_strided_slice %12 {offsets = [8, 0], sizes = [8, 256], strides = [1, 1]} : vector<32x256xf32> to vector<8x256xf32>
    %cst_21 = arith.constant dense<0.000000e+00> : vector<8x256xf32>
    %44 = tpu.matmul %42, %19, %cst_21 {dimension_numbers = #tpu.dot_dimension_numbers<[1], [0], [0], [1], [0, 0, 1, 1], [], []>} : vector<8x64xf32>, vector<64x256xbf16>, vector<8x256xf32> -> vector<8x256xf32>
    %45 = arith.addf %43, %44 : vector<8x256xf32>
    %cst_22 = arith.constant 5.000000e-01 : f32
    %46 = vector.broadcast %cst_22 : f32 to vector<8x256xf32>
    %47 = arith.mulf %46, %45 : vector<8x256xf32>
    %48 = arith.select %18, %45, %47 : vector<8x256xi1>, vector<8x256xf32>
    %49 = math.tanh %48 : vector<8x256xf32>
    %cst_23 = arith.constant 5.000000e-01 : f32
    %50 = vector.broadcast %cst_23 : f32 to vector<8x256xf32>
    %51 = arith.mulf %50, %49 : vector<8x256xf32>
    %cst_24 = arith.constant 5.000000e-01 : f32
    %52 = vector.broadcast %cst_24 : f32 to vector<8x256xf32>
    %53 = arith.addf %51, %52 : vector<8x256xf32>
    %54 = arith.select %18, %49, %53 : vector<8x256xi1>, vector<8x256xf32>
    %55 = vector.extract_strided_slice %54 {offsets = [0, 0], sizes = [8, 64], strides = [1, 1]} : vector<8x256xf32> to vector<8x64xf32>
    %56 = vector.extract_strided_slice %54 {offsets = [0, 64], sizes = [8, 64], strides = [1, 1]} : vector<8x256xf32> to vector<8x64xf32>
    %57 = vector.extract_strided_slice %54 {offsets = [0, 128], sizes = [8, 64], strides = [1, 1]} : vector<8x256xf32> to vector<8x64xf32>
    %58 = vector.extract_strided_slice %54 {offsets = [0, 192], sizes = [8, 64], strides = [1, 1]} : vector<8x256xf32> to vector<8x64xf32>
    %59 = arith.mulf %56, %40 : vector<8x64xf32>
    %60 = arith.mulf %55, %57 : vector<8x64xf32>
    %61 = arith.addf %59, %60 : vector<8x64xf32>
    %62 = math.tanh %61 : vector<8x64xf32>
    %63 = arith.mulf %58, %62 : vector<8x64xf32>
    %64 = vector.extract_strided_slice %12 {offsets = [16, 0], sizes = [8, 256], strides = [1, 1]} : vector<32x256xf32> to vector<8x256xf32>
    %cst_25 = arith.constant dense<0.000000e+00> : vector<8x256xf32>
    %65 = tpu.matmul %63, %19, %cst_25 {dimension_numbers = #tpu.dot_dimension_numbers<[1], [0], [0], [1], [0, 0, 1, 1], [], []>} : vector<8x64xf32>, vector<64x256xbf16>, vector<8x256xf32> -> vector<8x256xf32>
    %66 = arith.addf %64, %65 : vector<8x256xf32>
    %cst_26 = arith.constant 5.000000e-01 : f32
    %67 = vector.broadcast %cst_26 : f32 to vector<8x256xf32>
    %68 = arith.mulf %67, %66 : vector<8x256xf32>
    %69 = arith.select %18, %66, %68 : vector<8x256xi1>, vector<8x256xf32>
    %70 = math.tanh %69 : vector<8x256xf32>
    %cst_27 = arith.constant 5.000000e-01 : f32
    %71 = vector.broadcast %cst_27 : f32 to vector<8x256xf32>
    %72 = arith.mulf %71, %70 : vector<8x256xf32>
    %cst_28 = arith.constant 5.000000e-01 : f32
    %73 = vector.broadcast %cst_28 : f32 to vector<8x256xf32>
    %74 = arith.addf %72, %73 : vector<8x256xf32>
    %75 = arith.select %18, %70, %74 : vector<8x256xi1>, vector<8x256xf32>
    %76 = vector.extract_strided_slice %75 {offsets = [0, 0], sizes = [8, 64], strides = [1, 1]} : vector<8x256xf32> to vector<8x64xf32>
    %77 = vector.extract_strided_slice %75 {offsets = [0, 64], sizes = [8, 64], strides = [1, 1]} : vector<8x256xf32> to vector<8x64xf32>
    %78 = vector.extract_strided_slice %75 {offsets = [0, 128], sizes = [8, 64], strides = [1, 1]} : vector<8x256xf32> to vector<8x64xf32>
    %79 = vector.extract_strided_slice %75 {offsets = [0, 192], sizes = [8, 64], strides = [1, 1]} : vector<8x256xf32> to vector<8x64xf32>
    %80 = arith.mulf %77, %61 : vector<8x64xf32>
    %81 = arith.mulf %76, %78 : vector<8x64xf32>
    %82 = arith.addf %80, %81 : vector<8x64xf32>
    %83 = math.tanh %82 : vector<8x64xf32>
    %84 = arith.mulf %79, %83 : vector<8x64xf32>
    %85 = vector.extract_strided_slice %12 {offsets = [24, 0], sizes = [8, 256], strides = [1, 1]} : vector<32x256xf32> to vector<8x256xf32>
    %cst_29 = arith.constant dense<0.000000e+00> : vector<8x256xf32>
    %86 = tpu.matmul %84, %19, %cst_29 {dimension_numbers = #tpu.dot_dimension_numbers<[1], [0], [0], [1], [0, 0, 1, 1], [], []>} : vector<8x64xf32>, vector<64x256xbf16>, vector<8x256xf32> -> vector<8x256xf32>
    %87 = arith.addf %85, %86 : vector<8x256xf32>
    %cst_30 = arith.constant 5.000000e-01 : f32
    %88 = vector.broadcast %cst_30 : f32 to vector<8x256xf32>
    %89 = arith.mulf %88, %87 : vector<8x256xf32>
    %90 = arith.select %18, %87, %89 : vector<8x256xi1>, vector<8x256xf32>
    %91 = math.tanh %90 : vector<8x256xf32>
    %cst_31 = arith.constant 5.000000e-01 : f32
    %92 = vector.broadcast %cst_31 : f32 to vector<8x256xf32>
    %93 = arith.mulf %92, %91 : vector<8x256xf32>
    %cst_32 = arith.constant 5.000000e-01 : f32
    %94 = vector.broadcast %cst_32 : f32 to vector<8x256xf32>
    %95 = arith.addf %93, %94 : vector<8x256xf32>
    %96 = arith.select %18, %91, %95 : vector<8x256xi1>, vector<8x256xf32>
    %97 = vector.extract_strided_slice %96 {offsets = [0, 0], sizes = [8, 64], strides = [1, 1]} : vector<8x256xf32> to vector<8x64xf32>
    %98 = vector.extract_strided_slice %96 {offsets = [0, 64], sizes = [8, 64], strides = [1, 1]} : vector<8x256xf32> to vector<8x64xf32>
    %99 = vector.extract_strided_slice %96 {offsets = [0, 128], sizes = [8, 64], strides = [1, 1]} : vector<8x256xf32> to vector<8x64xf32>
    %100 = vector.extract_strided_slice %96 {offsets = [0, 192], sizes = [8, 64], strides = [1, 1]} : vector<8x256xf32> to vector<8x64xf32>
    %101 = arith.mulf %98, %82 : vector<8x64xf32>
    %102 = arith.mulf %97, %99 : vector<8x64xf32>
    %103 = arith.addf %101, %102 : vector<8x64xf32>
    %104 = math.tanh %103 : vector<8x64xf32>
    %105 = arith.mulf %100, %104 : vector<8x64xf32>
    %106 = vector.extract_strided_slice %7 {offsets = [24, 0], sizes = [8, 256], strides = [1, 1]} : vector<32x256xf32> to vector<8x256xf32>
    %107 = vector.extract_strided_slice %106 {offsets = [0, 0], sizes = [2, 256], strides = [1, 1]} : vector<8x256xf32> to vector<2x256xf32>
    %108 = vector.extract_strided_slice %105 {offsets = [0, 0], sizes = [2, 64], strides = [1, 1]} : vector<8x64xf32> to vector<2x64xf32>
    %109 = vector.extract_strided_slice %106 {offsets = [2, 0], sizes = [2, 256], strides = [1, 1]} : vector<8x256xf32> to vector<2x256xf32>
    %110 = arith.maximumf %107, %109 : vector<2x256xf32>
    %111 = vector.extract_strided_slice %105 {offsets = [2, 0], sizes = [2, 64], strides = [1, 1]} : vector<8x64xf32> to vector<2x64xf32>
    %112 = arith.maximumf %108, %111 : vector<2x64xf32>
    %113 = vector.extract_strided_slice %106 {offsets = [4, 0], sizes = [2, 256], strides = [1, 1]} : vector<8x256xf32> to vector<2x256xf32>
    %114 = arith.maximumf %110, %113 : vector<2x256xf32>
    %115 = vector.extract_strided_slice %105 {offsets = [4, 0], sizes = [2, 64], strides = [1, 1]} : vector<8x64xf32> to vector<2x64xf32>
    %116 = arith.maximumf %112, %115 : vector<2x64xf32>
    %117 = tpu.iota {dimensions = array<i32: 1>} : vector<1x512xi32>
    %c255_i32 = arith.constant 255 : i32
    %118 = vector.broadcast %c255_i32 : i32 to vector<1x512xi32>
    %119 = arith.andi %117, %118 : vector<1x512xi32>
    %c320_i32 = arith.constant 320 : i32
    %120 = vector.broadcast %c320_i32 : i32 to vector<1x512xi32>
    %121 = arith.muli %119, %120 : vector<1x512xi32>
    %c8_i32 = arith.constant 8 : i32
    %122 = vector.broadcast %c8_i32 : i32 to vector<1x512xi32>
    %123 = arith.shrsi %121, %122 : vector<1x512xi32>
    %c1_i32 = arith.constant 1 : i32
    %124 = vector.broadcast %c1_i32 : i32 to vector<1x512xi32>
    %125 = arith.addi %119, %124 : vector<1x512xi32>
    %c320_i32_33 = arith.constant 320 : i32
    %126 = vector.broadcast %c320_i32_33 : i32 to vector<1x512xi32>
    %127 = arith.muli %125, %126 : vector<1x512xi32>
    %c256_i32 = arith.constant 256 : i32
    %128 = vector.broadcast %c256_i32 : i32 to vector<1x512xi32>
    %129 = arith.addi %127, %128 : vector<1x512xi32>
    %c1_i32_34 = arith.constant 1 : i32
    %130 = vector.broadcast %c1_i32_34 : i32 to vector<1x512xi32>
    %131 = arith.subi %129, %130 : vector<1x512xi32>
    %c8_i32_35 = arith.constant 8 : i32
    %132 = vector.broadcast %c8_i32_35 : i32 to vector<1x512xi32>
    %133 = arith.shrsi %131, %132 : vector<1x512xi32>
    %c1_i32_36 = arith.constant 1 : i32
    %134 = vector.broadcast %c1_i32_36 : i32 to vector<1x512xi32>
    %135 = arith.subi %133, %134 : vector<1x512xi32>
    %c256_i32_37 = arith.constant 256 : i32
    %136 = vector.broadcast %c256_i32_37 : i32 to vector<1x512xi32>
    %137 = arith.cmpi sge, %117, %136 : vector<1x512xi32>
    %138 = arith.select %137, %135, %123 : vector<1x512xi1>, vector<1x512xi32>
    %139 = tpu.iota {dimensions = array<i32: 0>} : vector<256x1xi32>
    %c0_i32 = arith.constant 0 : i32
    %140 = vector.broadcast %c0_i32 : i32 to vector<256x1xi32>
    %141 = arith.addi %139, %140 : vector<256x1xi32>
    %142 = vector.broadcast %141 : vector<256x1xi32> to vector<256x512xi32>
    %143 = vector.broadcast %138 : vector<1x512xi32> to vector<256x512xi32>
    %144 = arith.cmpi eq, %142, %143 : vector<256x512xi32>
    %145 = arith.extui %144 : vector<256x512xi1> to vector<256x512xi32>
    %146 = arith.sitofp %145 : vector<256x512xi32> to vector<256x512xf32>
    %cst_38 = arith.constant dense<0.000000e+00> : vector<2x512xf32>
    %147 = tpu.matmul %114, %146, %cst_38 {dimension_numbers = #tpu.dot_dimension_numbers<[1], [0], [0], [1], [0, 0, 1, 1], [], []>} : vector<2x256xf32>, vector<256x512xf32>, vector<2x512xf32> -> vector<2x512xf32>
    %148 = tpu.iota {dimensions = array<i32: 0>} : vector<64x1xi32>
    %c256_i32_39 = arith.constant 256 : i32
    %149 = vector.broadcast %c256_i32_39 : i32 to vector<64x1xi32>
    %150 = arith.addi %148, %149 : vector<64x1xi32>
    %151 = vector.broadcast %150 : vector<64x1xi32> to vector<64x512xi32>
    %152 = vector.broadcast %138 : vector<1x512xi32> to vector<64x512xi32>
    %153 = arith.cmpi eq, %151, %152 : vector<64x512xi32>
    %154 = arith.extui %153 : vector<64x512xi1> to vector<64x512xi32>
    %155 = arith.sitofp %154 : vector<64x512xi32> to vector<64x512xf32>
    %cst_40 = arith.constant dense<0.000000e+00> : vector<2x512xf32>
    %156 = tpu.matmul %116, %155, %cst_40 {dimension_numbers = #tpu.dot_dimension_numbers<[1], [0], [0], [1], [0, 0, 1, 1], [], []>} : vector<2x64xf32>, vector<64x512xf32>, vector<2x512xf32> -> vector<2x512xf32>
    %157 = arith.addf %147, %156 : vector<2x512xf32>
    %158 = vector.extract_strided_slice %157 {offsets = [0, 0], sizes = [2, 256], strides = [1, 1]} : vector<2x512xf32> to vector<2x256xf32>
    %159 = vector.extract_strided_slice %157 {offsets = [0, 256], sizes = [2, 256], strides = [1, 1]} : vector<2x512xf32> to vector<2x256xf32>
    %160 = arith.maximumf %158, %159 : vector<2x256xf32>
    %c0_41 = arith.constant 0 : index
    %c0_42 = arith.constant 0 : index
    %161 = vector.load %arg7[%c0_41, %c0_42] : memref<256x64xf32, #tpu.memory_space<vmem>>, vector<256x64xf32>
    %cst_43 = arith.constant dense<0.000000e+00> : vector<2x64xf32>
    %162 = tpu.matmul %160, %161, %cst_43 {dimension_numbers = #tpu.dot_dimension_numbers<[1], [0], [0], [1], [0, 0, 1, 1], [], []>} : vector<2x256xf32>, vector<256x64xf32>, vector<2x64xf32> -> vector<2x64xf32>
    %c0_44 = arith.constant 0 : index
    %c0_45 = arith.constant 0 : index
    %163 = vector.load %arg8[%c0_44, %c0_45] : memref<1x64xf32, #tpu.memory_space<vmem>>, vector<1x64xf32>
    %164 = vector.broadcast %163 : vector<1x64xf32> to vector<2x64xf32>
    %165 = arith.addf %162, %164 : vector<2x64xf32>
    %cst_46 = arith.constant 0.000000e+00 : f32
    %166 = vector.broadcast %cst_46 : f32 to vector<2x64xf32>
    %167 = arith.maximumf %165, %166 : vector<2x64xf32>
    %c0_47 = arith.constant 0 : index
    %c0_48 = arith.constant 0 : index
    %168 = vector.load %arg9[%c0_47, %c0_48] : memref<64x128xbf16, #tpu.memory_space<vmem>>, vector<64x128xbf16>
    %cst_49 = arith.constant dense<0.000000e+00> : vector<2x128xf32>
    %169 = tpu.matmul %167, %168, %cst_49 {dimension_numbers = #tpu.dot_dimension_numbers<[1], [0], [0], [1], [0, 0, 1, 1], [], []>} : vector<2x64xf32>, vector<64x128xbf16>, vector<2x128xf32> -> vector<2x128xf32>
    %c0_50 = arith.constant 0 : index
    %c0_51 = arith.constant 0 : index
    %170 = vector.load %arg10[%c0_50, %c0_51] : memref<1x128xf32, #tpu.memory_space<vmem>>, vector<1x128xf32>
    %171 = vector.broadcast %170 : vector<1x128xf32> to vector<2x128xf32>
    %172 = arith.addf %169, %171 : vector<2x128xf32>
    %c0_52 = arith.constant 0 : index
    %c0_53 = arith.constant 0 : index
    %173 = vector.load %arg11[%c0_52, %c0_53] : memref<2x128xf32, #tpu.memory_space<vmem>>, vector<2x128xf32>
    tpu.vector_store %arg11[%c0_52, %c0_53], %172 {strides = array<i32>} : memref<2x128xf32, #tpu.memory_space<vmem>>, vector<2x128xf32>,
    return
  }
}

</mosaic_0001>

<llo_original>
// kernel: group_activity_forward.1
$region0: #{group_activity_forward.1}
  #allocation0 [shape = 'u32[]', space=smem, size = 0x4, offset = 0x4, fixed_abs, tag = 'smem constant byte address 0x4 - core index']
  #allocation1 [shape = 'u32[144,128]{1,0:T(1,128)}', space=vmem, size = 0x12000, scoped, tag = 'internal scratch']
  %s0 = inlined_call_operand.vmem [shape: f32[32,256], index: 0, kind: input, shape index: {}]
  %s1 = inlined_call_operand.vmem [shape: f32[256,4], index: 1, kind: input, shape index: {}]
  %s2 = inlined_call_operand.vmem [shape: bf16[4,256], index: 2, kind: input, shape index: {}]
  %s3 = inlined_call_operand.vmem [shape: f32[1,256], index: 3, kind: input, shape index: {}]
  %s4 = inlined_call_operand.vmem [shape: bf16[256,256], index: 4, kind: input, shape index: {}]
  %s5 = inlined_call_operand.vmem [shape: bf16[64,256], index: 5, kind: input, shape index: {}]
  %s6 = inlined_call_operand.vmem [shape: f32[1,256], index: 6, kind: input, shape index: {}]
  %s7 = inlined_call_operand.vmem [shape: f32[256,64], index: 7, kind: input, shape index: {}]
  %s8 = inlined_call_operand.vmem [shape: f32[1,64], index: 8, kind: input, shape index: {}]
  %s9 = inlined_call_operand.vmem [shape: bf16[64,128], index: 9, kind: input, shape index: {}]
  %s10 = inlined_call_operand.vmem [shape: f32[1,128], index: 10, kind: input, shape index: {}]
  %s11 = inlined_call_operand.hbm [shape: f32[2,128], index: 11, kind: output, shape index: {}]
  %s12 = sld [smem:[#allocation0]]
  $region54: #{group_activity_forward.1} parent=0
    _
  %s14 = ssub.s32 1, %s12
  %s15 = scalar_select 0, %s14, %s12
  $region1: #{group_activity_forward.1} parent=0
    #allocation2 [shape = 'u8[1024]{0}', space=vmem, size = 0x400, scoped, tag = 'output window, operand 0, single buffered']
    #allocation3 [shape = 's32[1]{0}', space=sflag, size = 0x4, scoped, tag = 'scoped memory for group_activity_forward.1']
    %16 = vsyncpa [#allocation3], 0
    // Predicated region
    $region2: #{group_activity_forward.1} parent=1 // pred_check
      _
    $region3: #{group_activity_forward.1} parent=1 // pred_check_branch
      %18 = sbr.rel (0) target = $region5
    $region4: #{group_activity_forward.1} parent=1 // pred_region
      _
    $region5: #{group_activity_forward.1} parent=1 // pred_fallthru
      _
    // Predicated region
    $region6: #{group_activity_forward.1} parent=1 // pred_check
      _
    $region7: #{group_activity_forward.1} parent=1 // pred_check_branch
      %20 = sbr.rel (0) target = $region9
    $region8: #{group_activity_forward.1} parent=1 // pred_region
      _
    $region9: #{group_activity_forward.1} parent=1 // pred_fallthru
      _
    // Predicated region
    $region10: #{group_activity_forward.1} parent=1 // pred_check
      _
    $region11: #{group_activity_forward.1} parent=1 // pred_check_branch
      %22 = sbr.rel (0) target = $region13
    $region12: #{group_activity_forward.1} parent=1 // pred_region
      _
    $region13: #{group_activity_forward.1} parent=1 // pred_fallthru
      _
    // Predicated region
    $region14: #{group_activity_forward.1} parent=1 // pred_check
      _
    $region15: #{group_activity_forward.1} parent=1 // pred_check_branch
      %24 = sbr.rel (0) target = $region17
    $region16: #{group_activity_forward.1} parent=1 // pred_region
      _
    $region17: #{group_activity_forward.1} parent=1 // pred_fallthru
      _
    // Predicated region
    $region18: #{group_activity_forward.1} parent=1 // pred_check
      _
    $region19: #{group_activity_forward.1} parent=1 // pred_check_branch
      %26 = sbr.rel (0) target = $region21
    $region20: #{group_activity_forward.1} parent=1 // pred_region
      _
    $region21: #{group_activity_forward.1} parent=1 // pred_fallthru
      _
    // Predicated region
    $region22: #{group_activity_forward.1} parent=1 // pred_check
      _
    $region23: #{group_activity_forward.1} parent=1 // pred_check_branch
      %28 = sbr.rel (0) target = $region25
    $region24: #{group_activity_forward.1} parent=1 // pred_region
      _
    $region25: #{group_activity_forward.1} parent=1 // pred_fallthru
      _
    // Predicated region
    $region26: #{group_activity_forward.1} parent=1 // pred_check
      _
    $region27: #{group_activity_forward.1} parent=1 // pred_check_branch
      %30 = sbr.rel (0) target = $region29
    $region28: #{group_activity_forward.1} parent=1 // pred_region
      _
    $region29: #{group_activity_forward.1} parent=1 // pred_fallthru
      _
    // Predicated region
    $region30: #{group_activity_forward.1} parent=1 // pred_check
      _
    $region31: #{group_activity_forward.1} parent=1 // pred_check_branch
      %32 = sbr.rel (0) target = $region33
    $region32: #{group_activity_forward.1} parent=1 // pred_region
      _
    $region33: #{group_activity_forward.1} parent=1 // pred_fallthru
      _
    // Predicated region
    $region34: #{group_activity_forward.1} parent=1 // pred_check
      _
    $region35: #{group_activity_forward.1} parent=1 // pred_check_branch
      %34 = sbr.rel (0) target = $region37
    $region36: #{group_activity_forward.1} parent=1 // pred_region
      _
    $region37: #{group_activity_forward.1} parent=1 // pred_fallthru
      _
    // Predicated region
    $region38: #{group_activity_forward.1} parent=1 // pred_check
      _
    $region39: #{group_activity_forward.1} parent=1 // pred_check_branch
      %36 = sbr.rel (0) target = $region41
    $region40: #{group_activity_forward.1} parent=1 // pred_region
      _
    $region41: #{group_activity_forward.1} parent=1 // pred_fallthru
      _
    // Predicated region
    $region42: #{group_activity_forward.1} parent=1 // pred_check
      _
    $region43: #{group_activity_forward.1} parent=1 // pred_check_branch
      %38 = sbr.rel (0) target = $region45
    $region44: #{group_activity_forward.1} parent=1 // pred_region
      _
    $region45: #{group_activity_forward.1} parent=1 // pred_fallthru
      _
    %v40 = vld [vmem:[%s0] sm:$0xff]
    %v41 = vld [vmem:[%s0 + $0x8] sm:$0xff]
    %v42 = vld [vmem:[%s0 + $0x10] sm:$0xff]
    %v43 = vld [vmem:[%s0 + $0x18] sm:$0xff]
    %v44 = vld [vmem:[%s0 + $0x20] sm:$0xff]
    %v45 = vld [vmem:[%s0 + $0x28] sm:$0xff]
    %v46 = vld [vmem:[%s0 + $0x30] sm:$0xff]
    %v47 = vld [vmem:[%s0 + $0x38] sm:$0xff]
    %v48 = vld [vmem:[%s1] sm:$0xff]
    %v49 = vld [vmem:[%s1 + $0x8] sm:$0xff]
    %v50 = vld [vmem:[%s1 + $0x10] sm:$0xff]
    %v51 = vld [vmem:[%s1 + $0x18] sm:$0xff]
    %v52 = vld [vmem:[%s1 + $0x20] sm:$0xff]
    %v53 = vld [vmem:[%s1 + $0x28] sm:$0xff]
    %v54 = vld [vmem:[%s1 + $0x30] sm:$0xff]
    %v55 = vld [vmem:[%s1 + $0x38] sm:$0xff]
    %v56 = vld [vmem:[%s1 + $0x40] sm:$0xff]
    %v57 = vld [vmem:[%s1 + $0x48] sm:$0xff]
    %v58 = vld [vmem:[%s1 + $0x50] sm:$0xff]
    %v59 = vld [vmem:[%s1 + $0x58] sm:$0xff]
    %v60 = vld [vmem:[%s1 + $0x60] sm:$0xff]
    %v61 = vld [vmem:[%s1 + $0x68] sm:$0xff]
    %v62 = vld [vmem:[%s1 + $0x70] sm:$0xff]
    %v63 = vld [vmem:[%s1 + $0x78] sm:$0xff]
    %v64 = vld [vmem:[%s1 + $0x80] sm:$0xff]
    %v65 = vld [vmem:[%s1 + $0x88] sm:$0xff]
    %v66 = vld [vmem:[%s1 + $0x90] sm:$0xff]
    %v67 = vld [vmem:[%s1 + $0x98] sm:$0xff]
    %v68 = vld [vmem:[%s1 + $0xa0] sm:$0xff]
    %v69 = vld [vmem:[%s1 + $0xa8] sm:$0xff]
    %v70 = vld [vmem:[%s1 + $0xb0] sm:$0xff]
    %v71 = vld [vmem:[%s1 + $0xb8] sm:$0xff]
    %v72 = vld [vmem:[%s1 + $0xc0] sm:$0xff]
    %v73 = vld [vmem:[%s1 + $0xc8] sm:$0xff]
    %v74 = vld [vmem:[%s1 + $0xd0] sm:$0xff]
    %v75 = vld [vmem:[%s1 + $0xd8] sm:$0xff]
    %v76 = vld [vmem:[%s1 + $0xe0] sm:$0xff]
    %v77 = vld [vmem:[%s1 + $0xe8] sm:$0xff]
    %v78 = vld [vmem:[%s1 + $0xf0] sm:$0xff]
    %v79 = vld [vmem:[%s1 + $0xf8] sm:$0xff]
    %80 = vmatprep.subr.mxu0 0.0
    %81 = vmatpush1.msra.mxu0 %v63
    %82 = vmatprep.subr.mxu0 0.0
    %83 = vmatpush1.msra.mxu0 %v62
    %84 = vmatprep.subr.mxu0 0.0
    %85 = vmatpush1.msra.mxu0 %v61
    %86 = vmatprep.subr.mxu0 0.0
    %87 = vmatpush1.msra.mxu0 %v60
    %88 = vmatprep.subr.mxu0 0.0
    %89 = vmatpush1.msra.mxu0 %v59
    %90 = vmatprep.subr.mxu0 0.0
    %91 = vmatpush1.msra.mxu0 %v58
    %92 = vmatprep.subr.mxu0 0.0
    %93 = vmatpush1.msra.mxu0 %v57
    %94 = vmatprep.subr.mxu0 0.0
    %95 = vmatpush1.msra.mxu0 %v56
    %96 = vmatprep.subr.mxu0 0.0
    %97 = vmatpush1.msra.mxu0 %v55
    %98 = vmatprep.subr.mxu0 0.0
    %99 = vmatpush1.msra.mxu0 %v54
    %100 = vmatprep.subr.mxu0 0.0
    %101 = vmatpush1.msra.mxu0 %v53
    %102 = vmatprep.subr.mxu0 0.0
    %103 = vmatpush1.msra.mxu0 %v52
    %104 = vmatprep.subr.mxu0 0.0
    %105 = vmatpush1.msra.mxu0 %v51
    %106 = vmatprep.subr.mxu0 0.0
    %107 = vmatpush1.msra.mxu0 %v50
    %108 = vmatprep.subr.mxu0 0.0
    %109 = vmatpush1.msra.mxu0 %v49
    %110 = vmatprep.subr.mxu0 0.0
    %111 = vmatpush1.msra.mxu0 %v48
    %112 = vmatprep.subr.mxu0 0.0
    %113 = vmatpush2.msra.mxu0 %v79
    %114 = vmatprep.subr.mxu0 0.0
    %115 = vmatpush2.msra.mxu0 %v78
    %116 = vmatprep.subr.mxu0 0.0
    %117 = vmatpush2.msra.mxu0 %v77
    %118 = vmatprep.subr.mxu0 0.0
    %119 = vmatpush2.msra.mxu0 %v76
    %120 = vmatprep.subr.mxu0 0.0
    %121 = vmatpush2.msra.mxu0 %v75
    %122 = vmatprep.subr.mxu0 0.0
    %123 = vmatpush2.msra.mxu0 %v74
    %124 = vmatprep.subr.mxu0 0.0
    %125 = vmatpush2.msra.mxu0 %v73
    %126 = vmatprep.subr.mxu0 0.0
    %127 = vmatpush2.msra.mxu0 %v72
    %128 = vmatprep.subr.mxu0 0.0
    %129 = vmatpush2.msra.mxu0 %v71
    %130 = vmatprep.subr.mxu0 0.0
    %131 = vmatpush2.msra.mxu0 %v70
    %132 = vmatprep.subr.mxu0 0.0
    %133 = vmatpush2.msra.mxu0 %v69
    %134 = vmatprep.subr.mxu0 0.0
    %135 = vmatpush2.msra.mxu0 %v68
    %136 = vmatprep.subr.mxu0 0.0
    %137 = vmatpush2.msra.mxu0 %v67
    %138 = vmatprep.subr.mxu0 0.0
    %139 = vmatpush2.msra.mxu0 %v66
    %140 = vmatprep.subr.mxu0 0.0
    %141 = vmatpush2.msra.mxu0 %v65
    %142 = vmatprep.subr.mxu0 0.0
    %143 = vmatpush2.msra.mxu0 %v64
    %144 = vmatprep.mubr.f32.mxu0 %v41
    %145 = vmatmul.mubr.f32.gmra.mxu0 %v40
    %v146 = vpop.f32.mrf.mxu0
    %v147 = vadd.f32 0.0, %v146
    %v148 = vpop.f32.mrf.mxu0
    %149 = vmatprep.mubr.f32.mxu0 %v43
    %150 = vmatmul.mubr.f32.gmra.mxu0 %v42
    %v151 = vpop.f32.mrf.mxu0
    %v152 = vadd.f32 0.0, %v151
    %v153 = vpop.f32.mrf.mxu0
    %154 = vmatprep.mubr.f32.mxu0 %v45
    %155 = vmatmul.mubr.f32.gmra.mxu0 %v44
    %v156 = vpop.f32.mrf.mxu0
    %v157 = vadd.f32 0.0, %v156
    %v158 = vpop.f32.mrf.mxu0
    %159 = vmatprep.mubr.f32.mxu0 %v47
    %160 = vmatmul.mubr.f32.gmra.mxu0 %v46
    %v161 = vpop.f32.mrf.mxu0
    %v162 = vadd.f32 0.0, %v161
    %v163 = vpop.f32.mrf.mxu0
    %164 = vdwg.mxu0
    %v165 = vld [vmem:[%s2] sm:$0xf]
    %v166 = vld [vmem:[%s3] sm:$0x3]
    %v168 = vlaneseq
    %v169 = vshrl.u32 %v168, 7
    %v170 = vsub.s32 0, %v169
    %v171 = vrot.slane %v166, %v170
    %v172 = vlaneseq
    %v173 = vshrl.u32 %v172, 7
    %v174 = vsub.s32 1, %v173
    %v175 = vrot.slane %v166, %v174
    %v180 = vunpack.c.l.s4 1983009808
    %v181 = vunpack.c.0.s8 %v180
    %v182 = vlaneseq
    %v183 = vshrl.u32 %v182, 7
    %v184 = vsub.s32 %v181, %v183
    %v185 = vrot.slane %v165, %v184
    %v186 = vcombine.high %v185, %v185
    %vm187 = vcmask 31744
    %v189 = vsel %vm187, %v147, 0
    %v192 = vsel %vm187, %v152, 0
    %v195 = vsel %vm187, %v157, 0
    %v198 = vsel %vm187, %v162, 0
    %vm200 = vcmask 1041408
    %v202 = vsel %vm200, %v185, 0
    %v205 = vsel %vm200, %v186, 0
    %207 = vmatprep.subr.bf16.mxu0 0
    %208 = vmatpush1.bf16.msra.mxu0 0
    %209 = vmatprep.subr.bf16.mxu0 0
    %210 = vmatpush1.bf16.msra.mxu0 0
    %211 = vmatprep.subr.bf16.mxu0 0
    %212 = vmatpush1.bf16.msra.mxu0 0
    %213 = vmatprep.subr.bf16.mxu0 0
    %214 = vmatpush1.bf16.msra.mxu0 0
    %215 = vmatprep.subr.bf16.mxu0 0
    %216 = vmatpush1.bf16.msra.mxu0 0
    %217 = vmatprep.subr.bf16.mxu0 0
    %218 = vmatpush1.bf16.msra.mxu0 0
    %219 = vmatprep.subr.bf16.mxu0 0
    %220 = vmatpush1.bf16.msra.mxu0 0
    %221 = vmatprep.subr.bf16.mxu0 %v205
    %222 = vmatpush1.bf16.msra.mxu0 %v202
    %223 = vmatprep.subr.bf16.mxu0 0
    %224 = vmatpush2.bf16.msra.mxu0 0
    %225 = vmatprep.subr.bf16.mxu0 0
    %226 = vmatpush2.bf16.msra.mxu0 0
    %227 = vmatprep.subr.bf16.mxu0 0
    %228 = vmatpush2.bf16.msra.mxu0 0
    %229 = vmatprep.subr.bf16.mxu0 0
    %230 = vmatpush2.bf16.msra.mxu0 0
    %231 = vmatprep.subr.bf16.mxu0 0
    %232 = vmatpush2.bf16.msra.mxu0 0
    %233 = vmatprep.subr.bf16.mxu0 0
    %234 = vmatpush2.bf16.msra.mxu0 0
    %235 = vmatprep.subr.bf16.mxu0 0
    %236 = vmatpush2.bf16.msra.mxu0 0
    %237 = vmatprep.subr.bf16.mxu0 0
    %238 = vmatpush2.bf16.msra.mxu0 0
    %239 = vmatprep.mubr.f32.mxu0 0.0
    %240 = vmatmul.mubr.f32.gmra.mxu0 %v189
    %v241 = vpop.f32.mrf.mxu0
    %v242 = vadd.f32 %v171, %v241
    %v243 = vpop.f32.mrf.mxu0
    %v244 = vadd.f32 %v175, %v243
    %245 = vmatprep.mubr.f32.mxu0 0.0
    %246 = vmatmul.mubr.f32.gmra.mxu0 %v192
    %v247 = vpop.f32.mrf.mxu0
    %v248 = vadd.f32 %v171, %v247
    %v249 = vpop.f32.mrf.mxu0
    %v250 = vadd.f32 %v175, %v249
    %251 = vmatprep.mubr.f32.mxu0 0.0
    %252 = vmatmul.mubr.f32.gmra.mxu0 %v195
    %v253 = vpop.f32.mrf.mxu0
    %v254 = vadd.f32 %v171, %v253
    %v255 = vpop.f32.mrf.mxu0
    %v256 = vadd.f32 %v175, %v255
    %257 = vmatprep.mubr.f32.mxu0 0.0
    %258 = vmatmul.mubr.f32.gmra.mxu0 %v198
    %v259 = vpop.f32.mrf.mxu0
    %v260 = vadd.f32 %v171, %v259
    %v261 = vpop.f32.mrf.mxu0
    %v262 = vadd.f32 %v175, %v261
    %263 = vdwg.mxu0
    %v264 = vld [vmem:[%s4] sm:$0xff]
    %v265 = vld [vmem:[%s4 + $0x8] sm:$0xff]
    %v266 = vld [vmem:[%s4 + $0x10] sm:$0xff]
    %v267 = vld [vmem:[%s4 + $0x18] sm:$0xff]
    %v268 = vld [vmem:[%s4 + $0x20] sm:$0xff]
    %v269 = vld [vmem:[%s4 + $0x28] sm:$0xff]
    %v270 = vld [vmem:[%s4 + $0x30] sm:$0xff]
    %v271 = vld [vmem:[%s4 + $0x38] sm:$0xff]
    %v272 = vld [vmem:[%s4 + $0x40] sm:$0xff]
    %v273 = vld [vmem:[%s4 + $0x48] sm:$0xff]
    %v274 = vld [vmem:[%s4 + $0x50] sm:$0xff]
    %v275 = vld [vmem:[%s4 + $0x58] sm:$0xff]
    %v276 = vld [vmem:[%s4 + $0x60] sm:$0xff]
    %v277 = vld [vmem:[%s4 + $0x68] sm:$0xff]
    %v278 = vld [vmem:[%s4 + $0x70] sm:$0xff]
    %v279 = vld [vmem:[%s4 + $0x78] sm:$0xff]
    %v280 = vld [vmem:[%s4 + $0x80] sm:$0xff]
    %v281 = vld [vmem:[%s4 + $0x88] sm:$0xff]
    %v282 = vld [vmem:[%s4 + $0x90] sm:$0xff]
    %v283 = vld [vmem:[%s4 + $0x98] sm:$0xff]
    %v284 = vld [vmem:[%s4 + $0xa0] sm:$0xff]
    %v285 = vld [vmem:[%s4 + $0xa8] sm:$0xff]
    %v286 = vld [vmem:[%s4 + $0xb0] sm:$0xff]
    %v287 = vld [vmem:[%s4 + $0xb8] sm:$0xff]
    %v288 = vld [vmem:[%s4 + $0xc0] sm:$0xff]
    %v289 = vld [vmem:[%s4 + $0xc8] sm:$0xff]
    %v290 = vld [vmem:[%s4 + $0xd0] sm:$0xff]
    %v291 = vld [vmem:[%s4 + $0xd8] sm:$0xff]
    %v292 = vld [vmem:[%s4 + $0xe0] sm:$0xff]
    %v293 = vld [vmem:[%s4 + $0xe8] sm:$0xff]
    %v294 = vld [vmem:[%s4 + $0xf0] sm:$0xff]
    %v295 = vld [vmem:[%s4 + $0xf8] sm:$0xff]
    %v296 = vld [vmem:[%s6] sm:$0x3]
    %v298 = vlaneseq
    %v299 = vshrl.u32 %v298, 7
    %v300 = vsub.s32 0, %v299
    %v301 = vrot.slane %v296, %v300
    %v302 = vlaneseq
    %v303 = vshrl.u32 %v302, 7
    %v304 = vsub.s32 1, %v303
    %v305 = vrot.slane %v296, %v304
    %v340 = vunpack.c.l.b16 %v264
    %v341 = vunpack.c.h.b16 %v264
    %v342 = vunpack.c.l.b16 %v265
    %v343 = vunpack.c.h.b16 %v265
    %v344 = vunpack.c.l.b16 %v266
    %v345 = vunpack.c.h.b16 %v266
    %v346 = vunpack.c.l.b16 %v267
    %v347 = vunpack.c.h.b16 %v267
    %v348 = vunpack.c.l.b16 %v268
    %v349 = vunpack.c.h.b16 %v268
    %v350 = vunpack.c.l.b16 %v269
    %v351 = vunpack.c.h.b16 %v269
    %v352 = vunpack.c.l.b16 %v270
    %v353 = vunpack.c.h.b16 %v270
    %v354 = vunpack.c.l.b16 %v271
    %v355 = vunpack.c.h.b16 %v271
    %v356 = vunpack.c.l.b16 %v272
    %v357 = vunpack.c.h.b16 %v272
    %v358 = vunpack.c.l.b16 %v273
    %v359 = vunpack.c.h.b16 %v273
    %v360 = vunpack.c.l.b16 %v274
    %v361 = vunpack.c.h.b16 %v274
    %v362 = vunpack.c.l.b16 %v275
    %v363 = vunpack.c.h.b16 %v275
    %v364 = vunpack.c.l.b16 %v276
    %v365 = vunpack.c.h.b16 %v276
    %v366 = vunpack.c.l.b16 %v277
    %v367 = vunpack.c.h.b16 %v277
    %v368 = vunpack.c.l.b16 %v278
    %v369 = vunpack.c.h.b16 %v278
    %v370 = vunpack.c.l.b16 %v279
    %v371 = vunpack.c.h.b16 %v279
    %v372 = vunpack.c.l.b16 %v280
    %v373 = vunpack.c.h.b16 %v280
    %v374 = vunpack.c.l.b16 %v281
    %v375 = vunpack.c.h.b16 %v281
    %v376 = vunpack.c.l.b16 %v282
    %v377 = vunpack.c.h.b16 %v282
    %v378 = vunpack.c.l.b16 %v283
    %v379 = vunpack.c.h.b16 %v283
    %v380 = vunpack.c.l.b16 %v284
    %v381 = vunpack.c.h.b16 %v284
    %v382 = vunpack.c.l.b16 %v285
    %v383 = vunpack.c.h.b16 %v285
    %v384 = vunpack.c.l.b16 %v286
    %v385 = vunpack.c.h.b16 %v286
    %v386 = vunpack.c.l.b16 %v287
    %v387 = vunpack.c.h.b16 %v287
    %v388 = vunpack.c.l.b16 %v288
    %v389 = vunpack.c.h.b16 %v288
    %v390 = vunpack.c.l.b16 %v289
    %v391 = vunpack.c.h.b16 %v289
    %v392 = vunpack.c.l.b16 %v290
    %v393 = vunpack.c.h.b16 %v290
    %v394 = vunpack.c.l.b16 %v291
    %v395 = vunpack.c.h.b16 %v291
    %v396 = vunpack.c.l.b16 %v292
    %v397 = vunpack.c.h.b16 %v292
    %v398 = vunpack.c.l.b16 %v293
    %v399 = vunpack.c.h.b16 %v293
    %v400 = vunpack.c.l.b16 %v294
    %v401 = vunpack.c.h.b16 %v294
    %v402 = vunpack.c.l.b16 %v295
    %v403 = vunpack.c.h.b16 %v295
    %v404 = vpack.c.b16 %v342, %v340
    %v405 = vpack.c.b16 %v343, %v341
    %v406 = vpack.c.b16 %v346, %v344
    %v407 = vpack.c.b16 %v347, %v345
    %v408 = vpack.c.b16 %v350, %v348
    %v409 = vpack.c.b16 %v351, %v349
    %v410 = vpack.c.b16 %v354, %v352
    %v411 = vpack.c.b16 %v355, %v353
    %v412 = vpack.c.b16 %v358, %v356
    %v413 = vpack.c.b16 %v359, %v357
    %v414 = vpack.c.b16 %v362, %v360
    %v415 = vpack.c.b16 %v363, %v361
    %v416 = vpack.c.b16 %v366, %v364
    %v417 = vpack.c.b16 %v367, %v365
    %v418 = vpack.c.b16 %v370, %v368
    %v419 = vpack.c.b16 %v371, %v369
    %v420 = vpack.c.b16 %v374, %v372
    %v421 = vpack.c.b16 %v375, %v373
    %v422 = vpack.c.b16 %v378, %v376
    %v423 = vpack.c.b16 %v379, %v377
    %v424 = vpack.c.b16 %v382, %v380
    %v425 = vpack.c.b16 %v383, %v381
    %v426 = vpack.c.b16 %v386, %v384
    %v427 = vpack.c.b16 %v387, %v385
    %v428 = vpack.c.b16 %v390, %v388
    %v429 = vpack.c.b16 %v391, %v389
    %v430 = vpack.c.b16 %v394, %v392
    %v431 = vpack.c.b16 %v395, %v393
    %v432 = vpack.c.b16 %v398, %v396
    %v433 = vpack.c.b16 %v399, %v397
    %v434 = vpack.c.b16 %v402, %v400
    %v435 = vpack.c.b16 %v403, %v401
    %468 = vmatprep.subr.bf16.mxu0 %v419
    %469 = vmatpush1.bf16.msra.mxu0 %v418
    %470 = vmatprep.subr.bf16.mxu0 %v417
    %471 = vmatpush1.bf16.msra.mxu0 %v416
    %472 = vmatprep.subr.bf16.mxu0 %v415
    %473 = vmatpush1.bf16.msra.mxu0 %v414
    %474 = vmatprep.subr.bf16.mxu0 %v413
    %475 = vmatpush1.bf16.msra.mxu0 %v412
    %476 = vmatprep.subr.bf16.mxu0 %v411
    %477 = vmatpush1.bf16.msra.mxu0 %v410
    %478 = vmatprep.subr.bf16.mxu0 %v409
    %479 = vmatpush1.bf16.msra.mxu0 %v408
    %480 = vmatprep.subr.bf16.mxu0 %v407
    %481 = vmatpush1.bf16.msra.mxu0 %v406
    %482 = vmatprep.subr.bf16.mxu0 %v405
    %483 = vmatpush1.bf16.msra.mxu0 %v404
    %484 = vmatprep.subr.bf16.mxu0 %v435
    %485 = vmatpush2.bf16.msra.mxu0 %v434
    %486 = vmatprep.subr.bf16.mxu0 %v433
    %487 = vmatpush2.bf16.msra.mxu0 %v432
    %488 = vmatprep.subr.bf16.mxu0 %v431
    %489 = vmatpush2.bf16.msra.mxu0 %v430
    %490 = vmatprep.subr.bf16.mxu0 %v429
    %491 = vmatpush2.bf16.msra.mxu0 %v428
    %492 = vmatprep.subr.bf16.mxu0 %v427
    %493 = vmatpush2.bf16.msra.mxu0 %v426
    %494 = vmatprep.subr.bf16.mxu0 %v425
    %495 = vmatpush2.bf16.msra.mxu0 %v424
    %496 = vmatprep.subr.bf16.mxu0 %v423
    %497 = vmatpush2.bf16.msra.mxu0 %v422
    %498 = vmatprep.subr.bf16.mxu0 %v421
    %499 = vmatpush2.bf16.msra.mxu0 %v420
    %500 = vmatprep.mubr.f32.mxu0 %v244
    %501 = vmatmul.mubr.f32.gmra.mxu0 %v242
    %v502 = vpop.f32.mrf.mxu0
    %v503 = vadd.f32 %v301, %v502
    %v504 = vpop.f32.mrf.mxu0
    %v505 = vadd.f32 %v305, %v504
    %506 = vmatprep.mubr.f32.mxu0 %v250
    %507 = vmatmul.mubr.f32.gmra.mxu0 %v248
    %v508 = vpop.f32.mrf.mxu0
    %v509 = vadd.f32 %v301, %v508
    %v510 = vpop.f32.mrf.mxu0
    %v511 = vadd.f32 %v305, %v510
    %512 = vmatprep.mubr.f32.mxu0 %v256
    %513 = vmatmul.mubr.f32.gmra.mxu0 %v254
    %v514 = vpop.f32.mrf.mxu0
    %v515 = vadd.f32 %v301, %v514
    %v516 = vpop.f32.mrf.mxu0
    %v517 = vadd.f32 %v305, %v516
    %518 = vmatprep.mubr.f32.mxu0 %v262
    %519 = vmatmul.mubr.f32.gmra.mxu0 %v260
    %v520 = vpop.f32.mrf.mxu0
    %v521 = vadd.f32 %v301, %v520
    %v522 = vpop.f32.mrf.mxu0
    %v523 = vadd.f32 %v305, %v522
    %524 = vdwg.mxu0
    %v525 = vlaneseq
    %v526 = vand.u32 %v525, 127
    %v527 = vadd.s32 %v526, 128
    %vm528 = vcmp.ge.s32.totalorder %v526, 128
    %vm529 = vcmp.ge.s32.totalorder %v527, 128
    %vm530 = vcmp.lt.s32.totalorder %v526, 192
    %vm531 = vcmp.lt.s32.totalorder %v527, 192
    %vm532 = vmand %vm528, %vm530
    %vm533 = vmand %vm529, %vm531
    %v534 = vld [vmem:[%s5] sm:$0xff]
    %v535 = vld [vmem:[%s5 + $0x8] sm:$0xff]
    %v536 = vld [vmem:[%s5 + $0x10] sm:$0xff]
    %v537 = vld [vmem:[%s5 + $0x18] sm:$0xff]
    %v538 = vld [vmem:[%s5 + $0x20] sm:$0xff]
    %v539 = vld [vmem:[%s5 + $0x28] sm:$0xff]
    %v540 = vld [vmem:[%s5 + $0x30] sm:$0xff]
    %v541 = vld [vmem:[%s5 + $0x38] sm:$0xff]
    %v550 = vunpack.c.l.b16 %v534
    %v551 = vunpack.c.h.b16 %v534
    %v552 = vunpack.c.l.b16 %v535
    %v553 = vunpack.c.h.b16 %v535
    %v554 = vunpack.c.l.b16 %v536
    %v555 = vunpack.c.h.b16 %v536
    %v556 = vunpack.c.l.b16 %v537
    %v557 = vunpack.c.h.b16 %v537
    %v558 = vunpack.c.l.b16 %v538
    %v559 = vunpack.c.h.b16 %v538
    %v560 = vunpack.c.l.b16 %v539
    %v561 = vunpack.c.h.b16 %v539
    %v562 = vunpack.c.l.b16 %v540
    %v563 = vunpack.c.h.b16 %v540
    %v564 = vunpack.c.l.b16 %v541
    %v565 = vunpack.c.h.b16 %v541
    %v566 = vpack.c.b16 %v552, %v550
    %v567 = vpack.c.b16 %v553, %v551
    %v568 = vpack.c.b16 %v556, %v554
    %v569 = vpack.c.b16 %v557, %v555
    %v570 = vpack.c.b16 %v560, %v558
    %v571 = vpack.c.b16 %v561, %v559
    %v572 = vpack.c.b16 %v564, %v562
    %v573 = vpack.c.b16 %v565, %v563
    %vm582 = vcmask 523264
    %v584 = vsel %vm582, 0.0, 0
    %586 = vmatprep.subr.bf16.mxu0 0
    %587 = vmatpush1.bf16.msra.mxu0 0
    %588 = vmatprep.subr.bf16.mxu0 0
    %589 = vmatpush1.bf16.msra.mxu0 0
    %590 = vmatprep.subr.bf16.mxu0 0
    %591 = vmatpush1.bf16.msra.mxu0 0
    %592 = vmatprep.subr.bf16.mxu0 0
    %593 = vmatpush1.bf16.msra.mxu0 0
    %594 = vmatprep.subr.bf16.mxu0 %v573
    %595 = vmatpush1.bf16.msra.mxu0 %v572
    %596 = vmatprep.subr.bf16.mxu0 %v571
    %597 = vmatpush1.bf16.msra.mxu0 %v570
    %598 = vmatprep.subr.bf16.mxu0 %v569
    %599 = vmatpush1.bf16.msra.mxu0 %v568
    %600 = vmatprep.subr.bf16.mxu0 %v567
    %601 = vmatpush1.bf16.msra.mxu0 %v566
    %602 = vmatprep.subr.bf16.mxu0 0
    %603 = vmatpush2.bf16.msra.mxu0 0
    %604 = vmatprep.subr.bf16.mxu0 0
    %605 = vmatpush2.bf16.msra.mxu0 0
    %606 = vmatprep.subr.bf16.mxu0 0
    %607 = vmatpush2.bf16.msra.mxu0 0
    %608 = vmatprep.subr.bf16.mxu0 0
    %609 = vmatpush2.bf16.msra.mxu0 0
    %610 = vmatprep.subr.bf16.mxu0 0
    %611 = vmatpush2.bf16.msra.mxu0 0
    %612 = vmatprep.subr.bf16.mxu0 0
    %613 = vmatpush2.bf16.msra.mxu0 0
    %614 = vmatprep.subr.bf16.mxu0 0
    %615 = vmatpush2.bf16.msra.mxu0 0
    %616 = vmatprep.subr.bf16.mxu0 0
    %617 = vmatpush2.bf16.msra.mxu0 0
    %618 = vmatprep.mubr.f32.mxu0 0.0
    %619 = vmatmul.mubr.f32.gmra.mxu0 %v584
    %v620 = vpop.f32.mrf.mxu0
    %v621 = vadd.f32 0.0, %v620
    %v622 = vpop.f32.mrf.mxu0
    %v623 = vadd.f32 0.0, %v622
    %624 = vdwg.mxu0
    %v625 = vadd.f32 %v503, %v621
    %v626 = vadd.f32 %v505, %v623
    %v627 = vmul.f32 %v625, 0.5
    %v628 = vmul.f32 %v626, 0.5
    %v629 = vsel %vm532, %v625, %v627
    %v630 = vsel %vm533, %v626, %v628
    %v631 = vtanh.pop %v629
    %v632 = vtanh.pop %v630
    %v633 = vmul.f32 %v631, 0.5
    %v634 = vmul.f32 %v632, 0.5
    %v635 = vadd.f32 %v633, 0.5
    %v636 = vadd.f32 %v634, 0.5
    %v637 = vsel %vm532, %v631, %v635
    %v638 = vsel %vm533, %v632, %v636
    %v639 = vmul.f32 %v637, 0.0
    %v640 = vmul.f32 %v637, %v638
    %642 = vrot.lane.b32.xlu0 %v640, 64
    %v643 = vpop.permute.xlu0 %642
    %v645 = vadd.f32 %v639, %v643
    %v646 = vtanh.pop %v645
    %v647 = vmul.f32 %v638, %v646
    %649 = vrot.lane.b32.xlu0 %v647, 64
    %v650 = vpop.permute.xlu0 %649
    %v651 = vsel %vm582, %v650, 0
    %653 = vmatprep.subr.bf16.mxu0 0
    %654 = vmatpush1.bf16.msra.mxu0 0
    %655 = vmatprep.subr.bf16.mxu0 0
    %656 = vmatpush1.bf16.msra.mxu0 0
    %657 = vmatprep.subr.bf16.mxu0 0
    %658 = vmatpush1.bf16.msra.mxu0 0
    %659 = vmatprep.subr.bf16.mxu0 0
    %660 = vmatpush1.bf16.msra.mxu0 0
    %661 = vmatprep.subr.bf16.mxu0 %v573
    %662 = vmatpush1.bf16.msra.mxu0 %v572
    %663 = vmatprep.subr.bf16.mxu0 %v571
    %664 = vmatpush1.bf16.msra.mxu0 %v570
    %665 = vmatprep.subr.bf16.mxu0 %v569
    %666 = vmatpush1.bf16.msra.mxu0 %v568
    %667 = vmatprep.subr.bf16.mxu0 %v567
    %668 = vmatpush1.bf16.msra.mxu0 %v566
    %669 = vmatprep.subr.bf16.mxu0 0
    %670 = vmatpush2.bf16.msra.mxu0 0
    %671 = vmatprep.subr.bf16.mxu0 0
    %672 = vmatpush2.bf16.msra.mxu0 0
    %673 = vmatprep.subr.bf16.mxu0 0
    %674 = vmatpush2.bf16.msra.mxu0 0
    %675 = vmatprep.subr.bf16.mxu0 0
    %676 = vmatpush2.bf16.msra.mxu0 0
    %677 = vmatprep.subr.bf16.mxu0 0
    %678 = vmatpush2.bf16.msra.mxu0 0
    %679 = vmatprep.subr.bf16.mxu0 0
    %680 = vmatpush2.bf16.msra.mxu0 0
    %681 = vmatprep.subr.bf16.mxu0 0
    %682 = vmatpush2.bf16.msra.mxu0 0
    %683 = vmatprep.subr.bf16.mxu0 0
    %684 = vmatpush2.bf16.msra.mxu0 0
    %685 = vmatprep.mubr.f32.mxu0 0.0
    %686 = vmatmul.mubr.f32.gmra.mxu0 %v651
    %v687 = vpop.f32.mrf.mxu0
    %v688 = vadd.f32 0.0, %v687
    %v689 = vpop.f32.mrf.mxu0
    %v690 = vadd.f32 0.0, %v689
    %691 = vdwg.mxu0
    %v692 = vadd.f32 %v509, %v688
    %v693 = vadd.f32 %v511, %v690
    %v694 = vmul.f32 %v692, 0.5
    %v695 = vmul.f32 %v693, 0.5
    %v696 = vsel %vm532, %v692, %v694
    %v697 = vsel %vm533, %v693, %v695
    %v698 = vtanh.pop %v696
    %v699 = vtanh.pop %v697
    %v700 = vmul.f32 %v698, 0.5
    %v701 = vmul.f32 %v699, 0.5
    %v702 = vadd.f32 %v700, 0.5
    %v703 = vadd.f32 %v701, 0.5
    %v704 = vsel %vm532, %v698, %v702
    %v705 = vsel %vm533, %v699, %v703
    %v706 = vmul.f32 %v704, %v645
    %v707 = vmul.f32 %v704, %v705
    %709 = vrot.lane.b32.xlu0 %v707, 64
    %v710 = vpop.permute.xlu0 %709
    %v712 = vadd.f32 %v706, %v710
    %v713 = vtanh.pop %v712
    %v714 = vmul.f32 %v705, %v713
    %716 = vrot.lane.b32.xlu0 %v714, 64
    %v717 = vpop.permute.xlu0 %716
    %v718 = vsel %vm582, %v717, 0
    %720 = vmatprep.subr.bf16.mxu0 0
    %721 = vmatpush1.bf16.msra.mxu0 0
    %722 = vmatprep.subr.bf16.mxu0 0
    %723 = vmatpush1.bf16.msra.mxu0 0
    %724 = vmatprep.subr.bf16.mxu0 0
    %725 = vmatpush1.bf16.msra.mxu0 0
    %726 = vmatprep.subr.bf16.mxu0 0
    %727 = vmatpush1.bf16.msra.mxu0 0
    %728 = vmatprep.subr.bf16.mxu0 %v573
    %729 = vmatpush1.bf16.msra.mxu0 %v572
    %730 = vmatprep.subr.bf16.mxu0 %v571
    %731 = vmatpush1.bf16.msra.mxu0 %v570
    %732 = vmatprep.subr.bf16.mxu0 %v569
    %733 = vmatpush1.bf16.msra.mxu0 %v568
    %734 = vmatprep.subr.bf16.mxu0 %v567
    %735 = vmatpush1.bf16.msra.mxu0 %v566
    %736 = vmatprep.subr.bf16.mxu0 0
    %737 = vmatpush2.bf16.msra.mxu0 0
    %738 = vmatprep.subr.bf16.mxu0 0
    %739 = vmatpush2.bf16.msra.mxu0 0
    %740 = vmatprep.subr.bf16.mxu0 0
    %741 = vmatpush2.bf16.msra.mxu0 0
    %742 = vmatprep.subr.bf16.mxu0 0
    %743 = vmatpush2.bf16.msra.mxu0 0
    %744 = vmatprep.subr.bf16.mxu0 0
    %745 = vmatpush2.bf16.msra.mxu0 0
    %746 = vmatprep.subr.bf16.mxu0 0
    %747 = vmatpush2.bf16.msra.mxu0 0
    %748 = vmatprep.subr.bf16.mxu0 0
    %749 = vmatpush2.bf16.msra.mxu0 0
    %750 = vmatprep.subr.bf16.mxu0 0
    %751 = vmatpush2.bf16.msra.mxu0 0
    %752 = vmatprep.mubr.f32.mxu0 0.0
    %753 = vmatmul.mubr.f32.gmra.mxu0 %v718
    %v754 = vpop.f32.mrf.mxu0
    %v755 = vadd.f32 0.0, %v754
    %v756 = vpop.f32.mrf.mxu0
    %v757 = vadd.f32 0.0, %v756
    %758 = vdwg.mxu0
    %v759 = vadd.f32 %v515, %v755
    %v760 = vadd.f32 %v517, %v757
    %v761 = vmul.f32 %v759, 0.5
    %v762 = vmul.f32 %v760, 0.5
    %v763 = vsel %vm532, %v759, %v761
    %v764 = vsel %vm533, %v760, %v762
    %v765 = vtanh.pop %v763
    %v766 = vtanh.pop %v764
    %v767 = vmul.f32 %v765, 0.5
    %v768 = vmul.f32 %v766, 0.5
    %v769 = vadd.f32 %v767, 0.5
    %v770 = vadd.f32 %v768, 0.5
    %v771 = vsel %vm532, %v765, %v769
    %v772 = vsel %vm533, %v766, %v770
    %v773 = vmul.f32 %v771, %v712
    %v774 = vmul.f32 %v771, %v772
    %776 = vrot.lane.b32.xlu0 %v774, 64
    %v777 = vpop.permute.xlu0 %776
    %v779 = vadd.f32 %v773, %v777
    %v780 = vtanh.pop %v779
    %v781 = vmul.f32 %v772, %v780
    %783 = vrot.lane.b32.xlu0 %v781, 64
    %v784 = vpop.permute.xlu0 %783
    %v785 = vsel %vm582, %v784, 0
    %787 = vmatprep.subr.bf16.mxu0 0
    %788 = vmatpush1.bf16.msra.mxu0 0
    %789 = vmatprep.subr.bf16.mxu0 0
    %790 = vmatpush1.bf16.msra.mxu0 0
    %791 = vmatprep.subr.bf16.mxu0 0
    %792 = vmatpush1.bf16.msra.mxu0 0
    %793 = vmatprep.subr.bf16.mxu0 0
    %794 = vmatpush1.bf16.msra.mxu0 0
    %795 = vmatprep.subr.bf16.mxu0 %v573
    %796 = vmatpush1.bf16.msra.mxu0 %v572
    %797 = vmatprep.subr.bf16.mxu0 %v571
    %798 = vmatpush1.bf16.msra.mxu0 %v570
    %799 = vmatprep.subr.bf16.mxu0 %v569
    %800 = vmatpush1.bf16.msra.mxu0 %v568
    %801 = vmatprep.subr.bf16.mxu0 %v567
    %802 = vmatpush1.bf16.msra.mxu0 %v566
    %803 = vmatprep.subr.bf16.mxu0 0
    %804 = vmatpush2.bf16.msra.mxu0 0
    %805 = vmatprep.subr.bf16.mxu0 0
    %806 = vmatpush2.bf16.msra.mxu0 0
    %807 = vmatprep.subr.bf16.mxu0 0
    %808 = vmatpush2.bf16.msra.mxu0 0
    %809 = vmatprep.subr.bf16.mxu0 0
    %810 = vmatpush2.bf16.msra.mxu0 0
    %811 = vmatprep.subr.bf16.mxu0 0
    %812 = vmatpush2.bf16.msra.mxu0 0
    %813 = vmatprep.subr.bf16.mxu0 0
    %814 = vmatpush2.bf16.msra.mxu0 0
    %815 = vmatprep.subr.bf16.mxu0 0
    %816 = vmatpush2.bf16.msra.mxu0 0
    %817 = vmatprep.subr.bf16.mxu0 0
    %818 = vmatpush2.bf16.msra.mxu0 0
    %819 = vmatprep.mubr.f32.mxu0 0.0
    %820 = vmatmul.mubr.f32.gmra.mxu0 %v785
    %v821 = vpop.f32.mrf.mxu0
    %v822 = vadd.f32 0.0, %v821
    %v823 = vpop.f32.mrf.mxu0
    %v824 = vadd.f32 0.0, %v823
    %825 = vdwg.mxu0
    %v826 = vadd.f32 %v521, %v822
    %v827 = vadd.f32 %v523, %v824
    %v828 = vmul.f32 %v826, 0.5
    %v829 = vmul.f32 %v827, 0.5
    %v830 = vsel %vm532, %v826, %v828
    %v831 = vsel %vm533, %v827, %v829
    %v832 = vtanh.pop %v830
    %v833 = vtanh.pop %v831
    %v834 = vmul.f32 %v832, 0.5
    %v835 = vmul.f32 %v833, 0.5
    %v836 = vadd.f32 %v834, 0.5
    %v837 = vadd.f32 %v835, 0.5
    %v838 = vsel %vm532, %v832, %v836
    %v839 = vsel %vm533, %v833, %v837
    %v840 = vmul.f32 %v838, %v779
    %v841 = vmul.f32 %v838, %v839
    %843 = vrot.lane.b32.xlu0 %v841, 64
    %v844 = vpop.permute.xlu0 %843
    %v846 = vadd.f32 %v840, %v844
    %v847 = vtanh.pop %v846
    %v848 = vmul.f32 %v839, %v847
    %v851 = vrot.slane %v260, 2
    %v852 = vrot.slane %v262, 2
    %v855 = vmax.f32 %v260, %v851
    %v856 = vmax.f32 %v262, %v852
    %v858 = vrot.slane %v848, 2
    %v860 = vmax.f32 %v848, %v858
    %v861 = vrot.slane %v260, 4
    %v862 = vrot.slane %v262, 4
    %v865 = vmax.f32 %v855, %v861
    %v866 = vmax.f32 %v856, %v862
    %v867 = vrot.slane %v848, 4
    %v869 = vmax.f32 %v860, %v867
    %v870 = vadd.s32 %v526, 256
    %v871 = vadd.s32 %v526, 384
    %v872 = vand.u32 %v526, 255
    %v873 = vand.u32 %v527, 255
    %v874 = vand.u32 %v870, 255
    %v875 = vand.u32 %v871, 255
    %v876 = vmul.u32 %v872, 320
    %v877 = vmul.u32 %v873, 320
    %v878 = vmul.u32 %v874, 320
    %v879 = vmul.u32 %v875, 320
    %v880 = vshra.s32 %v876, 8
    %v881 = vshra.s32 %v877, 8
    %v882 = vshra.s32 %v878, 8
    %v883 = vshra.s32 %v879, 8
    %v884 = vadd.s32 %v872, 1
    %v885 = vadd.s32 %v873, 1
    %v886 = vadd.s32 %v874, 1
    %v887 = vadd.s32 %v875, 1
    %v888 = vmul.u32 %v884, 320
    %v889 = vmul.u32 %v885, 320
    %v890 = vmul.u32 %v886, 320
    %v891 = vmul.u32 %v887, 320
    %v892 = vadd.s32 %v888, 256
    %v893 = vadd.s32 %v889, 256
    %v894 = vadd.s32 %v890, 256
    %v895 = vadd.s32 %v891, 256
    %v896 = vsub.s32 %v892, 1
    %v897 = vsub.s32 %v893, 1
    %v898 = vsub.s32 %v894, 1
    %v899 = vsub.s32 %v895, 1
    %v900 = vshra.s32 %v896, 8
    %v901 = vshra.s32 %v897, 8
    %v902 = vshra.s32 %v898, 8
    %v903 = vshra.s32 %v899, 8
    %v904 = vsub.s32 %v900, 1
    %v905 = vsub.s32 %v901, 1
    %v906 = vsub.s32 %v902, 1
    %v907 = vsub.s32 %v903, 1
    %vm908 = vcmp.ge.s32.totalorder %v526, 256
    %vm909 = vcmp.ge.s32.totalorder %v527, 256
    %vm910 = vcmp.ge.s32.totalorder %v870, 256
    %vm911 = vcmp.ge.s32.totalorder %v871, 256
    %v912 = vsel %vm908, %v904, %v880
    %v913 = vsel %vm909, %v905, %v881
    %v914 = vsel %vm910, %v906, %v882
    %v915 = vsel %vm911, %v907, %v883
    %v916 = vlaneseq
    %v917 = vshrl.u32 %v916, 7
    %v918 = vadd.s32 %v917, 8
    %v919 = vadd.s32 %v917, 16
    %v920 = vadd.s32 %v917, 24
    %v921 = vadd.s32 %v917, 32
    %v922 = vadd.s32 %v917, 40
    %v923 = vadd.s32 %v917, 48
    %v924 = vadd.s32 %v917, 56
    %v925 = vadd.s32 %v917, 64
    %v926 = vadd.s32 %v917, 72
    %v927 = vadd.s32 %v917, 80
    %v928 = vadd.s32 %v917, 88
    %v929 = vadd.s32 %v917, 96
    %v930 = vadd.s32 %v917, 104
    %v931 = vadd.s32 %v917, 112
    %v932 = vadd.s32 %v917, 120
    %v933 = vadd.s32 %v917, 128
    %v934 = vadd.s32 %v917, 136
    %v935 = vadd.s32 %v917, 144
    %v936 = vadd.s32 %v917, 152
    %v937 = vadd.s32 %v917, 160
    %v938 = vadd.s32 %v917, 168
    %v939 = vadd.s32 %v917, 176
    %v940 = vadd.s32 %v917, 184
    %v941 = vadd.s32 %v917, 192
    %v942 = vadd.s32 %v917, 200
    %v943 = vadd.s32 %v917, 208
    %v944 = vadd.s32 %v917, 216
    %v945 = vadd.s32 %v917, 224
    %v946 = vadd.s32 %v917, 232
    %v947 = vadd.s32 %v917, 240
    %v948 = vadd.s32 %v917, 248
    %vm949 = vcmp.eq.s32.totalorder %v917, %v912
    %vm950 = vcmp.eq.s32.totalorder %v917, %v913
    %vm951 = vcmp.eq.s32.totalorder %v917, %v914
    %vm952 = vcmp.eq.s32.totalorder %v917, %v915
    %vm953 = vcmp.eq.s32.totalorder %v918, %v912
    %vm954 = vcmp.eq.s32.totalorder %v918, %v913
    %vm955 = vcmp.eq.s32.totalorder %v918, %v914
    %vm956 = vcmp.eq.s32.totalorder %v918, %v915
    %vm957 = vcmp.eq.s32.totalorder %v919, %v912
    %vm958 = vcmp.eq.s32.totalorder %v919, %v913
    %vm959 = vcmp.eq.s32.totalorder %v919, %v914
    %vm960 = vcmp.eq.s32.totalorder %v919, %v915
    %vm961 = vcmp.eq.s32.totalorder %v920, %v912
    %vm962 = vcmp.eq.s32.totalorder %v920, %v913
    %vm963 = vcmp.eq.s32.totalorder %v920, %v914
    %vm964 = vcmp.eq.s32.totalorder %v920, %v915
    %vm965 = vcmp.eq.s32.totalorder %v921, %v912
    %vm966 = vcmp.eq.s32.totalorder %v921, %v913
    %vm967 = vcmp.eq.s32.totalorder %v921, %v914
    %vm968 = vcmp.eq.s32.totalorder %v921, %v915
    %vm969 = vcmp.eq.s32.totalorder %v922, %v912
    %vm970 = vcmp.eq.s32.totalorder %v922, %v913
    %vm971 = vcmp.eq.s32.totalorder %v922, %v914
    %vm972 = vcmp.eq.s32.totalorder %v922, %v915
    %vm973 = vcmp.eq.s32.totalorder %v923, %v912
    %vm974 = vcmp.eq.s32.totalorder %v923, %v913
    %vm975 = vcmp.eq.s32.totalorder %v923, %v914
    %vm976 = vcmp.eq.s32.totalorder %v923, %v915
    %vm977 = vcmp.eq.s32.totalorder %v924, %v912
    %vm978 = vcmp.eq.s32.totalorder %v924, %v913
    %vm979 = vcmp.eq.s32.totalorder %v924, %v914
    %vm980 = vcmp.eq.s32.totalorder %v924, %v915
    %vm981 = vcmp.eq.s32.totalorder %v925, %v912
    %vm982 = vcmp.eq.s32.totalorder %v925, %v913
    %vm983 = vcmp.eq.s32.totalorder %v925, %v914
    %vm984 = vcmp.eq.s32.totalorder %v925, %v915
    %vm985 = vcmp.eq.s32.totalorder %v926, %v912
    %vm986 = vcmp.eq.s32.totalorder %v926, %v913
    %vm987 = vcmp.eq.s32.totalorder %v926, %v914
    %vm988 = vcmp.eq.s32.totalorder %v926, %v915
    %vm989 = vcmp.eq.s32.totalorder %v927, %v912
    %vm990 = vcmp.eq.s32.totalorder %v927, %v913
    %vm991 = vcmp.eq.s32.totalorder %v927, %v914
    %vm992 = vcmp.eq.s32.totalorder %v927, %v915
    %vm993 = vcmp.eq.s32.totalorder %v928, %v912
    %vm994 = vcmp.eq.s32.totalorder %v928, %v913
    %vm995 = vcmp.eq.s32.totalorder %v928, %v914
    %vm996 = vcmp.eq.s32.totalorder %v928, %v915
    %vm997 = vcmp.eq.s32.totalorder %v929, %v912
    %vm998 = vcmp.eq.s32.totalorder %v929, %v913
    %vm999 = vcmp.eq.s32.totalorder %v929, %v914
    %vm1000 = vcmp.eq.s32.totalorder %v929, %v915
    %vm1001 = vcmp.eq.s32.totalorder %v930, %v912
    %vm1002 = vcmp.eq.s32.totalorder %v930, %v913
    %vm1003 = vcmp.eq.s32.totalorder %v930, %v914
    %vm1004 = vcmp.eq.s32.totalorder %v930, %v915
    %vm1005 = vcmp.eq.s32.totalorder %v931, %v912
    %vm1006 = vcmp.eq.s32.totalorder %v931, %v913
    %vm1007 = vcmp.eq.s32.totalorder %v931, %v914
    %vm1008 = vcmp.eq.s32.totalorder %v931, %v915
    %vm1009 = vcmp.eq.s32.totalorder %v932, %v912
    %vm1010 = vcmp.eq.s32.totalorder %v932, %v913
    %vm1011 = vcmp.eq.s32.totalorder %v932, %v914
    %vm1012 = vcmp.eq.s32.totalorder %v932, %v915
    %vm1013 = vcmp.eq.s32.totalorder %v933, %v912
    %vm1014 = vcmp.eq.s32.totalorder %v933, %v913
    %vm1015 = vcmp.eq.s32.totalorder %v933, %v914
    %vm1016 = vcmp.eq.s32.totalorder %v933, %v915
    %vm1017 = vcmp.eq.s32.totalorder %v934, %v912
    %vm1018 = vcmp.eq.s32.totalorder %v934, %v913
    %vm1019 = vcmp.eq.s32.totalorder %v934, %v914
    %vm1020 = vcmp.eq.s32.totalorder %v934, %v915
    %vm1021 = vcmp.eq.s32.totalorder %v935, %v912
    %vm1022 = vcmp.eq.s32.totalorder %v935, %v913
    %vm1023 = vcmp.eq.s32.totalorder %v935, %v914
    %vm1024 = vcmp.eq.s32.totalorder %v935, %v915
    %vm1025 = vcmp.eq.s32.totalorder %v936, %v912
    %vm1026 = vcmp.eq.s32.totalorder %v936, %v913
    %vm1027 = vcmp.eq.s32.totalorder %v936, %v914
    %vm1028 = vcmp.eq.s32.totalorder %v936, %v915
    %vm1029 = vcmp.eq.s32.totalorder %v937, %v912
    %vm1030 = vcmp.eq.s32.totalorder %v937, %v913
    %vm1031 = vcmp.eq.s32.totalorder %v937, %v914
    %vm1032 = vcmp.eq.s32.totalorder %v937, %v915
    %vm1033 = vcmp.eq.s32.totalorder %v938, %v912
    %vm1034 = vcmp.eq.s32.totalorder %v938, %v913
    %vm1035 = vcmp.eq.s32.totalorder %v938, %v914
    %vm1036 = vcmp.eq.s32.totalorder %v938, %v915
    %vm1037 = vcmp.eq.s32.totalorder %v939, %v912
    %vm1038 = vcmp.eq.s32.totalorder %v939, %v913
    %vm1039 = vcmp.eq.s32.totalorder %v939, %v914
    %vm1040 = vcmp.eq.s32.totalorder %v939, %v915
    %vm1041 = vcmp.eq.s32.totalorder %v940, %v912
    %vm1042 = vcmp.eq.s32.totalorder %v940, %v913
    %vm1043 = vcmp.eq.s32.totalorder %v940, %v914
    %vm1044 = vcmp.eq.s32.totalorder %v940, %v915
    %vm1045 = vcmp.eq.s32.totalorder %v941, %v912
    %vm1046 = vcmp.eq.s32.totalorder %v941, %v913
    %vm1047 = vcmp.eq.s32.totalorder %v941, %v914
    %vm1048 = vcmp.eq.s32.totalorder %v941, %v915
    %vm1049 = vcmp.eq.s32.totalorder %v942, %v912
    %vm1050 = vcmp.eq.s32.totalorder %v942, %v913
    %vm1051 = vcmp.eq.s32.totalorder %v942, %v914
    %vm1052 = vcmp.eq.s32.totalorder %v942, %v915
    %vm1053 = vcmp.eq.s32.totalorder %v943, %v912
    %vm1054 = vcmp.eq.s32.totalorder %v943, %v913
    %vm1055 = vcmp.eq.s32.totalorder %v943, %v914
    %vm1056 = vcmp.eq.s32.totalorder %v943, %v915
    %vm1057 = vcmp.eq.s32.totalorder %v944, %v912
    %vm1058 = vcmp.eq.s32.totalorder %v944, %v913
    %vm1059 = vcmp.eq.s32.totalorder %v944, %v914
    %vm1060 = vcmp.eq.s32.totalorder %v944, %v915
    %vm1061 = vcmp.eq.s32.totalorder %v945, %v912
    %vm1062 = vcmp.eq.s32.totalorder %v945, %v913
    %vm1063 = vcmp.eq.s32.totalorder %v945, %v914
    %vm1064 = vcmp.eq.s32.totalorder %v945, %v915
    %vm1065 = vcmp.eq.s32.totalorder %v946, %v912
    %vm1066 = vcmp.eq.s32.totalorder %v946, %v913
    %vm1067 = vcmp.eq.s32.totalorder %v946, %v914
    %vm1068 = vcmp.eq.s32.totalorder %v946, %v915
    %vm1069 = vcmp.eq.s32.totalorder %v947, %v912
    %vm1070 = vcmp.eq.s32.totalorder %v947, %v913
    %vm1071 = vcmp.eq.s32.totalorder %v947, %v914
    %vm1072 = vcmp.eq.s32.totalorder %v947, %v915
    %vm1073 = vcmp.eq.s32.totalorder %v948, %v912
    %vm1074 = vcmp.eq.s32.totalorder %v948, %v913
    %vm1075 = vcmp.eq.s32.totalorder %v948, %v914
    %vm1076 = vcmp.eq.s32.totalorder %v948, %v915
    %v1077 = vsel %vm949, 1, 0
    %v1078 = vsel %vm950, 1, 0
    %v1079 = vsel %vm951, 1, 0
    %v1080 = vsel %vm952, 1, 0
    %v1081 = vsel %vm953, 1, 0
    %v1082 = vsel %vm954, 1, 0
    %v1083 = vsel %vm955, 1, 0
    %v1084 = vsel %vm956, 1, 0
    %v1085 = vsel %vm957, 1, 0
    %v1086 = vsel %vm958, 1, 0
    %v1087 = vsel %vm959, 1, 0
    %v1088 = vsel %vm960, 1, 0
    %v1089 = vsel %vm961, 1, 0
    %v1090 = vsel %vm962, 1, 0
    %v1091 = vsel %vm963, 1, 0
    %v1092 = vsel %vm964, 1, 0
    %v1093 = vsel %vm965, 1, 0
    %v1094 = vsel %vm966, 1, 0
    %v1095 = vsel %vm967, 1, 0
    %v1096 = vsel %vm968, 1, 0
    %v1097 = vsel %vm969, 1, 0
    %v1098 = vsel %vm970, 1, 0
    %v1099 = vsel %vm971, 1, 0
    %v1100 = vsel %vm972, 1, 0
    %v1101 = vsel %vm973, 1, 0
    %v1102 = vsel %vm974, 1, 0
    %v1103 = vsel %vm975, 1, 0
    %v1104 = vsel %vm976, 1, 0
    %v1105 = vsel %vm977, 1, 0
    %v1106 = vsel %vm978, 1, 0
    %v1107 = vsel %vm979, 1, 0
    %v1108 = vsel %vm980, 1, 0
    %v1109 = vsel %vm981, 1, 0
    %v1110 = vsel %vm982, 1, 0
    %v1111 = vsel %vm983, 1, 0
    %v1112 = vsel %vm984, 1, 0
    %v1113 = vsel %vm985, 1, 0
    %v1114 = vsel %vm986, 1, 0
    %v1115 = vsel %vm987, 1, 0
    %v1116 = vsel %vm988, 1, 0
    %v1117 = vsel %vm989, 1, 0
    %v1118 = vsel %vm990, 1, 0
    %v1119 = vsel %vm991, 1, 0
    %v1120 = vsel %vm992, 1, 0
    %v1121 = vsel %vm993, 1, 0
    %v1122 = vsel %vm994, 1, 0
    %v1123 = vsel %vm995, 1, 0
    %v1124 = vsel %vm996, 1, 0
    %v1125 = vsel %vm997, 1, 0
    %v1126 = vsel %vm998, 1, 0
    %v1127 = vsel %vm999, 1, 0
    %v1128 = vsel %vm1000, 1, 0
    %v1129 = vsel %vm1001, 1, 0
    %v1130 = vsel %vm1002, 1, 0
    %v1131 = vsel %vm1003, 1, 0
    %v1132 = vsel %vm1004, 1, 0
    %v1133 = vsel %vm1005, 1, 0
    %v1134 = vsel %vm1006, 1, 0
    %v1135 = vsel %vm1007, 1, 0
    %v1136 = vsel %vm1008, 1, 0
    %v1137 = vsel %vm1009, 1, 0
    %v1138 = vsel %vm1010, 1, 0
    %v1139 = vsel %vm1011, 1, 0
    %v1140 = vsel %vm1012, 1, 0
    %v1141 = vsel %vm1013, 1, 0
    %v1142 = vsel %vm1014, 1, 0
    %v1143 = vsel %vm1015, 1, 0
    %v1144 = vsel %vm1016, 1, 0
    %v1145 = vsel %vm1017, 1, 0
    %v1146 = vsel %vm1018, 1, 0
    %v1147 = vsel %vm1019, 1, 0
    %v1148 = vsel %vm1020, 1, 0
    %v1149 = vsel %vm1021, 1, 0
    %v1150 = vsel %vm1022, 1, 0
    %v1151 = vsel %vm1023, 1, 0
    %v1152 = vsel %vm1024, 1, 0
    %v1153 = vsel %vm1025, 1, 0
    %v1154 = vsel %vm1026, 1, 0
    %v1155 = vsel %vm1027, 1, 0
    %v1156 = vsel %vm1028, 1, 0
    %v1157 = vsel %vm1029, 1, 0
    %v1158 = vsel %vm1030, 1, 0
    %v1159 = vsel %vm1031, 1, 0
    %v1160 = vsel %vm1032, 1, 0
    %v1161 = vsel %vm1033, 1, 0
    %v1162 = vsel %vm1034, 1, 0
    %v1163 = vsel %vm1035, 1, 0
    %v1164 = vsel %vm1036, 1, 0
    %v1165 = vsel %vm1037, 1, 0
    %v1166 = vsel %vm1038, 1, 0
    %v1167 = vsel %vm1039, 1, 0
    %v1168 = vsel %vm1040, 1, 0
    %v1169 = vsel %vm1041, 1, 0
    %v1170 = vsel %vm1042, 1, 0
    %v1171 = vsel %vm1043, 1, 0
    %v1172 = vsel %vm1044, 1, 0
    %v1173 = vsel %vm1045, 1, 0
    %v1174 = vsel %vm1046, 1, 0
    %v1175 = vsel %vm1047, 1, 0
    %v1176 = vsel %vm1048, 1, 0
    %v1177 = vsel %vm1049, 1, 0
    %v1178 = vsel %vm1050, 1, 0
    %v1179 = vsel %vm1051, 1, 0
    %v1180 = vsel %vm1052, 1, 0
    %v1181 = vsel %vm1053, 1, 0
    %v1182 = vsel %vm1054, 1, 0
    %v1183 = vsel %vm1055, 1, 0
    %v1184 = vsel %vm1056, 1, 0
    %v1185 = vsel %vm1057, 1, 0
    %v1186 = vsel %vm1058, 1, 0
    %v1187 = vsel %vm1059, 1, 0
    %v1188 = vsel %vm1060, 1, 0
    %v1189 = vsel %vm1061, 1, 0
    %v1190 = vsel %vm1062, 1, 0
    %v1191 = vsel %vm1063, 1, 0
    %v1192 = vsel %vm1064, 1, 0
    %v1193 = vsel %vm1065, 1, 0
    %v1194 = vsel %vm1066, 1, 0
    %v1195 = vsel %vm1067, 1, 0
    %v1196 = vsel %vm1068, 1, 0
    %v1197 = vsel %vm1069, 1, 0
    %v1198 = vsel %vm1070, 1, 0
    %v1199 = vsel %vm1071, 1, 0
    %v1200 = vsel %vm1072, 1, 0
    %v1201 = vsel %vm1073, 1, 0
    %v1202 = vsel %vm1074, 1, 0
    %v1203 = vsel %vm1075, 1, 0
    %v1204 = vsel %vm1076, 1, 0
    %v1205 = vcvt.s32.f32 %v1077
    %v1206 = vcvt.s32.f32 %v1078
    %v1207 = vcvt.s32.f32 %v1079
    %v1208 = vcvt.s32.f32 %v1080
    %v1209 = vcvt.s32.f32 %v1081
    %v1210 = vcvt.s32.f32 %v1082
    %v1211 = vcvt.s32.f32 %v1083
    %v1212 = vcvt.s32.f32 %v1084
    %v1213 = vcvt.s32.f32 %v1085
    %v1214 = vcvt.s32.f32 %v1086
    %v1215 = vcvt.s32.f32 %v1087
    %v1216 = vcvt.s32.f32 %v1088
    %v1217 = vcvt.s32.f32 %v1089
    %v1218 = vcvt.s32.f32 %v1090
    %v1219 = vcvt.s32.f32 %v1091
    %v1220 = vcvt.s32.f32 %v1092
    %v1221 = vcvt.s32.f32 %v1093
    %v1222 = vcvt.s32.f32 %v1094
    %v1223 = vcvt.s32.f32 %v1095
    %v1224 = vcvt.s32.f32 %v1096
    %v1225 = vcvt.s32.f32 %v1097
    %v1226 = vcvt.s32.f32 %v1098
    %v1227 = vcvt.s32.f32 %v1099
    %v1228 = vcvt.s32.f32 %v1100
    %v1229 = vcvt.s32.f32 %v1101
    %v1230 = vcvt.s32.f32 %v1102
    %v1231 = vcvt.s32.f32 %v1103
    %v1232 = vcvt.s32.f32 %v1104
    %v1233 = vcvt.s32.f32 %v1105
    %v1234 = vcvt.s32.f32 %v1106
    %v1235 = vcvt.s32.f32 %v1107
    %v1236 = vcvt.s32.f32 %v1108
    %v1237 = vcvt.s32.f32 %v1109
    %v1238 = vcvt.s32.f32 %v1110
    %v1239 = vcvt.s32.f32 %v1111
    %v1240 = vcvt.s32.f32 %v1112
    %v1241 = vcvt.s32.f32 %v1113
    %v1242 = vcvt.s32.f32 %v1114
    %v1243 = vcvt.s32.f32 %v1115
    %v1244 = vcvt.s32.f32 %v1116
    %v1245 = vcvt.s32.f32 %v1117
    %v1246 = vcvt.s32.f32 %v1118
    %v1247 = vcvt.s32.f32 %v1119
    %v1248 = vcvt.s32.f32 %v1120
    %v1249 = vcvt.s32.f32 %v1121
    %v1250 = vcvt.s32.f32 %v1122
    %v1251 = vcvt.s32.f32 %v1123
    %v1252 = vcvt.s32.f32 %v1124
    %v1253 = vcvt.s32.f32 %v1125
    %v1254 = vcvt.s32.f32 %v1126
    %v1255 = vcvt.s32.f32 %v1127
    %v1256 = vcvt.s32.f32 %v1128
    %v1257 = vcvt.s32.f32 %v1129
    %v1258 = vcvt.s32.f32 %v1130
    %v1259 = vcvt.s32.f32 %v1131
    %v1260 = vcvt.s32.f32 %v1132
    %v1261 = vcvt.s32.f32 %v1133
    %v1262 = vcvt.s32.f32 %v1134
    %v1263 = vcvt.s32.f32 %v1135
    %v1264 = vcvt.s32.f32 %v1136
    %v1265 = vcvt.s32.f32 %v1137
    %v1266 = vcvt.s32.f32 %v1138
    %v1267 = vcvt.s32.f32 %v1139
    %v1268 = vcvt.s32.f32 %v1140
    %v1269 = vcvt.s32.f32 %v1141
    %v1270 = vcvt.s32.f32 %v1142
    %v1271 = vcvt.s32.f32 %v1143
    %v1272 = vcvt.s32.f32 %v1144
    %v1273 = vcvt.s32.f32 %v1145
    %v1274 = vcvt.s32.f32 %v1146
    %v1275 = vcvt.s32.f32 %v1147
    %v1276 = vcvt.s32.f32 %v1148
    %v1277 = vcvt.s32.f32 %v1149
    %v1278 = vcvt.s32.f32 %v1150
    %v1279 = vcvt.s32.f32 %v1151
    %v1280 = vcvt.s32.f32 %v1152
    %v1281 = vcvt.s32.f32 %v1153
    %v1282 = vcvt.s32.f32 %v1154
    %v1283 = vcvt.s32.f32 %v1155
    %v1284 = vcvt.s32.f32 %v1156
    %v1285 = vcvt.s32.f32 %v1157
    %v1286 = vcvt.s32.f32 %v1158
    %v1287 = vcvt.s32.f32 %v1159
    %v1288 = vcvt.s32.f32 %v1160
    %v1289 = vcvt.s32.f32 %v1161
    %v1290 = vcvt.s32.f32 %v1162
    %v1291 = vcvt.s32.f32 %v1163
    %v1292 = vcvt.s32.f32 %v1164
    %v1293 = vcvt.s32.f32 %v1165
    %v1294 = vcvt.s32.f32 %v1166
    %v1295 = vcvt.s32.f32 %v1167
    %v1296 = vcvt.s32.f32 %v1168
    %v1297 = vcvt.s32.f32 %v1169
    %v1298 = vcvt.s32.f32 %v1170
    %v1299 = vcvt.s32.f32 %v1171
    %v1300 = vcvt.s32.f32 %v1172
    %v1301 = vcvt.s32.f32 %v1173
    %v1302 = vcvt.s32.f32 %v1174
    %v1303 = vcvt.s32.f32 %v1175
    %v1304 = vcvt.s32.f32 %v1176
    %v1305 = vcvt.s32.f32 %v1177
    %v1306 = vcvt.s32.f32 %v1178
    %v1307 = vcvt.s32.f32 %v1179
    %v1308 = vcvt.s32.f32 %v1180
    %v1309 = vcvt.s32.f32 %v1181
    %v1310 = vcvt.s32.f32 %v1182
    %v1311 = vcvt.s32.f32 %v1183
    %v1312 = vcvt.s32.f32 %v1184
    %v1313 = vcvt.s32.f32 %v1185
    %v1314 = vcvt.s32.f32 %v1186
    %v1315 = vcvt.s32.f32 %v1187
    %v1316 = vcvt.s32.f32 %v1188
    %v1317 = vcvt.s32.f32 %v1189
    %v1318 = vcvt.s32.f32 %v1190
    %v1319 = vcvt.s32.f32 %v1191
    %v1320 = vcvt.s32.f32 %v1192
    %v1321 = vcvt.s32.f32 %v1193
    %v1322 = vcvt.s32.f32 %v1194
    %v1323 = vcvt.s32.f32 %v1195
    %v1324 = vcvt.s32.f32 %v1196
    %v1325 = vcvt.s32.f32 %v1197
    %v1326 = vcvt.s32.f32 %v1198
    %v1327 = vcvt.s32.f32 %v1199
    %v1328 = vcvt.s32.f32 %v1200
    %v1329 = vcvt.s32.f32 %v1201
    %v1330 = vcvt.s32.f32 %v1202
    %v1331 = vcvt.s32.f32 %v1203
    %v1332 = vcvt.s32.f32 %v1204
    %v1333 = vadd.s32 %v917, 256
    %v1334 = vadd.s32 %v918, 256
    %v1335 = vadd.s32 %v919, 256
    %v1336 = vadd.s32 %v920, 256
    %v1337 = vadd.s32 %v921, 256
    %v1338 = vadd.s32 %v922, 256
    %v1339 = vadd.s32 %v923, 256
    %v1340 = vadd.s32 %v924, 256
    %vm1341 = vcmp.eq.s32.totalorder %v1333, %v912
    %vm1342 = vcmp.eq.s32.totalorder %v1333, %v913
    %vm1343 = vcmp.eq.s32.totalorder %v1333, %v914
    %vm1344 = vcmp.eq.s32.totalorder %v1333, %v915
    %vm1345 = vcmp.eq.s32.totalorder %v1334, %v912
    %vm1346 = vcmp.eq.s32.totalorder %v1334, %v913
    %vm1347 = vcmp.eq.s32.totalorder %v1334, %v914
    %vm1348 = vcmp.eq.s32.totalorder %v1334, %v915
    %vm1349 = vcmp.eq.s32.totalorder %v1335, %v912
    %vm1350 = vcmp.eq.s32.totalorder %v1335, %v913
    %vm1351 = vcmp.eq.s32.totalorder %v1335, %v914
    %vm1352 = vcmp.eq.s32.totalorder %v1335, %v915
    %vm1353 = vcmp.eq.s32.totalorder %v1336, %v912
    %vm1354 = vcmp.eq.s32.totalorder %v1336, %v913
    %vm1355 = vcmp.eq.s32.totalorder %v1336, %v914
    %vm1356 = vcmp.eq.s32.totalorder %v1336, %v915
    %vm1357 = vcmp.eq.s32.totalorder %v1337, %v912
    %vm1358 = vcmp.eq.s32.totalorder %v1337, %v913
    %vm1359 = vcmp.eq.s32.totalorder %v1337, %v914
    %vm1360 = vcmp.eq.s32.totalorder %v1337, %v915
    %vm1361 = vcmp.eq.s32.totalorder %v1338, %v912
    %vm1362 = vcmp.eq.s32.totalorder %v1338, %v913
    %vm1363 = vcmp.eq.s32.totalorder %v1338, %v914
    %vm1364 = vcmp.eq.s32.totalorder %v1338, %v915
    %vm1365 = vcmp.eq.s32.totalorder %v1339, %v912
    %vm1366 = vcmp.eq.s32.totalorder %v1339, %v913
    %vm1367 = vcmp.eq.s32.totalorder %v1339, %v914
    %vm1368 = vcmp.eq.s32.totalorder %v1339, %v915
    %vm1369 = vcmp.eq.s32.totalorder %v1340, %v912
    %vm1370 = vcmp.eq.s32.totalorder %v1340, %v913
    %vm1371 = vcmp.eq.s32.totalorder %v1340, %v914
    %vm1372 = vcmp.eq.s32.totalorder %v1340, %v915
    %v1373 = vsel %vm1341, 1, 0
    %v1374 = vsel %vm1342, 1, 0
    %v1375 = vsel %vm1343, 1, 0
    %v1376 = vsel %vm1344, 1, 0
    %v1377 = vsel %vm1345, 1, 0
    %v1378 = vsel %vm1346, 1, 0
    %v1379 = vsel %vm1347, 1, 0
    %v1380 = vsel %vm1348, 1, 0
    %v1381 = vsel %vm1349, 1, 0
    %v1382 = vsel %vm1350, 1, 0
    %v1383 = vsel %vm1351, 1, 0
    %v1384 = vsel %vm1352, 1, 0
    %v1385 = vsel %vm1353, 1, 0
    %v1386 = vsel %vm1354, 1, 0
    %v1387 = vsel %vm1355, 1, 0
    %v1388 = vsel %vm1356, 1, 0
    %v1389 = vsel %vm1357, 1, 0
    %v1390 = vsel %vm1358, 1, 0
    %v1391 = vsel %vm1359, 1, 0
    %v1392 = vsel %vm1360, 1, 0
    %v1393 = vsel %vm1361, 1, 0
    %v1394 = vsel %vm1362, 1, 0
    %v1395 = vsel %vm1363, 1, 0
    %v1396 = vsel %vm1364, 1, 0
    %v1397 = vsel %vm1365, 1, 0
    %v1398 = vsel %vm1366, 1, 0
    %v1399 = vsel %vm1367, 1, 0
    %v1400 = vsel %vm1368, 1, 0
    %v1401 = vsel %vm1369, 1, 0
    %v1402 = vsel %vm1370, 1, 0
    %v1403 = vsel %vm1371, 1, 0
    %v1404 = vsel %vm1372, 1, 0
    %v1405 = vcvt.s32.f32 %v1373
    %v1406 = vcvt.s32.f32 %v1374
    %v1407 = vcvt.s32.f32 %v1375
    %v1408 = vcvt.s32.f32 %v1376
    %v1409 = vcvt.s32.f32 %v1377
    %v1410 = vcvt.s32.f32 %v1378
    %v1411 = vcvt.s32.f32 %v1379
    %v1412 = vcvt.s32.f32 %v1380
    %v1413 = vcvt.s32.f32 %v1381
    %v1414 = vcvt.s32.f32 %v1382
    %v1415 = vcvt.s32.f32 %v1383
    %v1416 = vcvt.s32.f32 %v1384
    %v1417 = vcvt.s32.f32 %v1385
    %v1418 = vcvt.s32.f32 %v1386
    %v1419 = vcvt.s32.f32 %v1387
    %v1420 = vcvt.s32.f32 %v1388
    %v1421 = vcvt.s32.f32 %v1389
    %v1422 = vcvt.s32.f32 %v1390
    %v1423 = vcvt.s32.f32 %v1391
    %v1424 = vcvt.s32.f32 %v1392
    %v1425 = vcvt.s32.f32 %v1393
    %v1426 = vcvt.s32.f32 %v1394
    %v1427 = vcvt.s32.f32 %v1395
    %v1428 = vcvt.s32.f32 %v1396
    %v1429 = vcvt.s32.f32 %v1397
    %v1430 = vcvt.s32.f32 %v1398
    %v1431 = vcvt.s32.f32 %v1399
    %v1432 = vcvt.s32.f32 %v1400
    %v1433 = vcvt.s32.f32 %v1401
    %v1434 = vcvt.s32.f32 %v1402
    %v1435 = vcvt.s32.f32 %v1403
    %v1436 = vcvt.s32.f32 %v1404
    %1438 = vrot.lane.b32.xlu0 %v869, 64
    %v1439 = vpop.permute.xlu0 %1438
    %v1440 = vsel %vm582, %v1439, 0
    %1442 = vmatprep.subr.mxu0 0.0
    %1443 = vmatpush1.msra.mxu0 0.0
    %1444 = vmatprep.subr.mxu0 0.0
    %1445 = vmatpush1.msra.mxu0 0.0
    %1446 = vmatprep.subr.mxu0 0.0
    %1447 = vmatpush1.msra.mxu0 0.0
    %1448 = vmatprep.subr.mxu0 0.0
    %1449 = vmatpush1.msra.mxu0 0.0
    %1450 = vmatprep.subr.mxu0 0.0
    %1451 = vmatpush1.msra.mxu0 0.0
    %1452 = vmatprep.subr.mxu0 0.0
    %1453 = vmatpush1.msra.mxu0 0.0
    %1454 = vmatprep.subr.mxu0 0.0
    %1455 = vmatpush1.msra.mxu0 0.0
    %1456 = vmatprep.subr.mxu0 0.0
    %1457 = vmatpush1.msra.mxu0 0.0
    %1458 = vmatprep.subr.mxu0 %v1434
    %1459 = vmatpush1.msra.mxu0 %v1433
    %1460 = vmatprep.subr.mxu0 %v1430
    %1461 = vmatpush1.msra.mxu0 %v1429
    %1462 = vmatprep.subr.mxu0 %v1426
    %1463 = vmatpush1.msra.mxu0 %v1425
    %1464 = vmatprep.subr.mxu0 %v1422
    %1465 = vmatpush1.msra.mxu0 %v1421
    %1466 = vmatprep.subr.mxu0 %v1418
    %1467 = vmatpush1.msra.mxu0 %v1417
    %1468 = vmatprep.subr.mxu0 %v1414
    %1469 = vmatpush1.msra.mxu0 %v1413
    %1470 = vmatprep.subr.mxu0 %v1410
    %1471 = vmatpush1.msra.mxu0 %v1409
    %1472 = vmatprep.subr.mxu0 %v1406
    %1473 = vmatpush1.msra.mxu0 %v1405
    %1474 = vmatprep.subr.mxu0 0.0
    %1475 = vmatpush2.msra.mxu0 0.0
    %1476 = vmatprep.subr.mxu0 0.0
    %1477 = vmatpush2.msra.mxu0 0.0
    %1478 = vmatprep.subr.mxu0 0.0
    %1479 = vmatpush2.msra.mxu0 0.0
    %1480 = vmatprep.subr.mxu0 0.0
    %1481 = vmatpush2.msra.mxu0 0.0
    %1482 = vmatprep.subr.mxu0 0.0
    %1483 = vmatpush2.msra.mxu0 0.0
    %1484 = vmatprep.subr.mxu0 0.0
    %1485 = vmatpush2.msra.mxu0 0.0
    %1486 = vmatprep.subr.mxu0 0.0
    %1487 = vmatpush2.msra.mxu0 0.0
    %1488 = vmatprep.subr.mxu0 0.0
    %1489 = vmatpush2.msra.mxu0 0.0
    %1490 = vmatprep.subr.mxu0 0.0
    %1491 = vmatpush2.msra.mxu0 0.0
    %1492 = vmatprep.subr.mxu0 0.0
    %1493 = vmatpush2.msra.mxu0 0.0
    %1494 = vmatprep.subr.mxu0 0.0
    %1495 = vmatpush2.msra.mxu0 0.0
    %1496 = vmatprep.subr.mxu0 0.0
    %1497 = vmatpush2.msra.mxu0 0.0
    %1498 = vmatprep.subr.mxu0 0.0
    %1499 = vmatpush2.msra.mxu0 0.0
    %1500 = vmatprep.subr.mxu0 0.0
    %1501 = vmatpush2.msra.mxu0 0.0
    %1502 = vmatprep.subr.mxu0 0.0
    %1503 = vmatpush2.msra.mxu0 0.0
    %1504 = vmatprep.subr.mxu0 0.0
    %1505 = vmatpush2.msra.mxu0 0.0
    %1506 = vmatprep.mubr.f32.mxu0 0.0
    %1507 = vmatmul.mubr.f32.gmra.mxu0 %v1440
    %v1508 = vpop.f32.mrf.mxu0
    %v1509 = vadd.f32 0.0, %v1508
    %v1510 = vpop.f32.mrf.mxu0
    %v1511 = vadd.f32 0.0, %v1510
    %1512 = vdwg.mxu0
    %1513 = vmatprep.subr.mxu0 0.0
    %1514 = vmatpush1.msra.mxu0 0.0
    %1515 = vmatprep.subr.mxu0 0.0
    %1516 = vmatpush1.msra.mxu0 0.0
    %1517 = vmatprep.subr.mxu0 0.0
    %1518 = vmatpush1.msra.mxu0 0.0
    %1519 = vmatprep.subr.mxu0 0.0
    %1520 = vmatpush1.msra.mxu0 0.0
    %1521 = vmatprep.subr.mxu0 0.0
    %1522 = vmatpush1.msra.mxu0 0.0
    %1523 = vmatprep.subr.mxu0 0.0
    %1524 = vmatpush1.msra.mxu0 0.0
    %1525 = vmatprep.subr.mxu0 0.0
    %1526 = vmatpush1.msra.mxu0 0.0
    %1527 = vmatprep.subr.mxu0 0.0
    %1528 = vmatpush1.msra.mxu0 0.0
    %1529 = vmatprep.subr.mxu0 %v1436
    %1530 = vmatpush1.msra.mxu0 %v1435
    %1531 = vmatprep.subr.mxu0 %v1432
    %1532 = vmatpush1.msra.mxu0 %v1431
    %1533 = vmatprep.subr.mxu0 %v1428
    %1534 = vmatpush1.msra.mxu0 %v1427
    %1535 = vmatprep.subr.mxu0 %v1424
    %1536 = vmatpush1.msra.mxu0 %v1423
    %1537 = vmatprep.subr.mxu0 %v1420
    %1538 = vmatpush1.msra.mxu0 %v1419
    %1539 = vmatprep.subr.mxu0 %v1416
    %1540 = vmatpush1.msra.mxu0 %v1415
    %1541 = vmatprep.subr.mxu0 %v1412
    %1542 = vmatpush1.msra.mxu0 %v1411
    %1543 = vmatprep.subr.mxu0 %v1408
    %1544 = vmatpush1.msra.mxu0 %v1407
    %1545 = vmatprep.subr.mxu0 0.0
    %1546 = vmatpush2.msra.mxu0 0.0
    %1547 = vmatprep.subr.mxu0 0.0
    %1548 = vmatpush2.msra.mxu0 0.0
    %1549 = vmatprep.subr.mxu0 0.0
    %1550 = vmatpush2.msra.mxu0 0.0
    %1551 = vmatprep.subr.mxu0 0.0
    %1552 = vmatpush2.msra.mxu0 0.0
    %1553 = vmatprep.subr.mxu0 0.0
    %1554 = vmatpush2.msra.mxu0 0.0
    %1555 = vmatprep.subr.mxu0 0.0
    %1556 = vmatpush2.msra.mxu0 0.0
    %1557 = vmatprep.subr.mxu0 0.0
    %1558 = vmatpush2.msra.mxu0 0.0
    %1559 = vmatprep.subr.mxu0 0.0
    %1560 = vmatpush2.msra.mxu0 0.0
    %1561 = vmatprep.subr.mxu0 0.0
    %1562 = vmatpush2.msra.mxu0 0.0
    %1563 = vmatprep.subr.mxu0 0.0
    %1564 = vmatpush2.msra.mxu0 0.0
    %1565 = vmatprep.subr.mxu0 0.0
    %1566 = vmatpush2.msra.mxu0 0.0
    %1567 = vmatprep.subr.mxu0 0.0
    %1568 = vmatpush2.msra.mxu0 0.0
    %1569 = vmatprep.subr.mxu0 0.0
    %1570 = vmatpush2.msra.mxu0 0.0
    %1571 = vmatprep.subr.mxu0 0.0
    %1572 = vmatpush2.msra.mxu0 0.0
    %1573 = vmatprep.subr.mxu0 0.0
    %1574 = vmatpush2.msra.mxu0 0.0
    %1575 = vmatprep.subr.mxu0 0.0
    %1576 = vmatpush2.msra.mxu0 0.0
    %1577 = vmatprep.mubr.f32.mxu0 0.0
    %1578 = vmatmul.mubr.f32.gmra.mxu0 %v1440
    %v1579 = vpop.f32.mrf.mxu0
    %v1580 = vadd.f32 0.0, %v1579
    %v1581 = vpop.f32.mrf.mxu0
    %v1582 = vadd.f32 0.0, %v1581
    %1583 = vdwg.mxu0
    %1584 = vmatprep.subr.mxu0 %v1266
    %1585 = vmatpush1.msra.mxu0 %v1265
    %1586 = vmatprep.subr.mxu0 %v1262
    %1587 = vmatpush1.msra.mxu0 %v1261
    %1588 = vmatprep.subr.mxu0 %v1258
    %1589 = vmatpush1.msra.mxu0 %v1257
    %1590 = vmatprep.subr.mxu0 %v1254
    %1591 = vmatpush1.msra.mxu0 %v1253
    %1592 = vmatprep.subr.mxu0 %v1250
    %1593 = vmatpush1.msra.mxu0 %v1249
    %1594 = vmatprep.subr.mxu0 %v1246
    %1595 = vmatpush1.msra.mxu0 %v1245
    %1596 = vmatprep.subr.mxu0 %v1242
    %1597 = vmatpush1.msra.mxu0 %v1241
    %1598 = vmatprep.subr.mxu0 %v1238
    %1599 = vmatpush1.msra.mxu0 %v1237
    %1600 = vmatprep.subr.mxu0 %v1234
    %1601 = vmatpush1.msra.mxu0 %v1233
    %1602 = vmatprep.subr.mxu0 %v1230
    %1603 = vmatpush1.msra.mxu0 %v1229
    %1604 = vmatprep.subr.mxu0 %v1226
    %1605 = vmatpush1.msra.mxu0 %v1225
    %1606 = vmatprep.subr.mxu0 %v1222
    %1607 = vmatpush1.msra.mxu0 %v1221
    %1608 = vmatprep.subr.mxu0 %v1218
    %1609 = vmatpush1.msra.mxu0 %v1217
    %1610 = vmatprep.subr.mxu0 %v1214
    %1611 = vmatpush1.msra.mxu0 %v1213
    %1612 = vmatprep.subr.mxu0 %v1210
    %1613 = vmatpush1.msra.mxu0 %v1209
    %1614 = vmatprep.subr.mxu0 %v1206
    %1615 = vmatpush1.msra.mxu0 %v1205
    %1616 = vmatprep.subr.mxu0 %v1330
    %1617 = vmatpush2.msra.mxu0 %v1329
    %1618 = vmatprep.subr.mxu0 %v1326
    %1619 = vmatpush2.msra.mxu0 %v1325
    %1620 = vmatprep.subr.mxu0 %v1322
    %1621 = vmatpush2.msra.mxu0 %v1321
    %1622 = vmatprep.subr.mxu0 %v1318
    %1623 = vmatpush2.msra.mxu0 %v1317
    %1624 = vmatprep.subr.mxu0 %v1314
    %1625 = vmatpush2.msra.mxu0 %v1313
    %1626 = vmatprep.subr.mxu0 %v1310
    %1627 = vmatpush2.msra.mxu0 %v1309
    %1628 = vmatprep.subr.mxu0 %v1306
    %1629 = vmatpush2.msra.mxu0 %v1305
    %1630 = vmatprep.subr.mxu0 %v1302
    %1631 = vmatpush2.msra.mxu0 %v1301
    %1632 = vmatprep.subr.mxu0 %v1298
    %1633 = vmatpush2.msra.mxu0 %v1297
    %1634 = vmatprep.subr.mxu0 %v1294
    %1635 = vmatpush2.msra.mxu0 %v1293
    %1636 = vmatprep.subr.mxu0 %v1290
    %1637 = vmatpush2.msra.mxu0 %v1289
    %1638 = vmatprep.subr.mxu0 %v1286
    %1639 = vmatpush2.msra.mxu0 %v1285
    %1640 = vmatprep.subr.mxu0 %v1282
    %1641 = vmatpush2.msra.mxu0 %v1281
    %1642 = vmatprep.subr.mxu0 %v1278
    %1643 = vmatpush2.msra.mxu0 %v1277
    %1644 = vmatprep.subr.mxu0 %v1274
    %1645 = vmatpush2.msra.mxu0 %v1273
    %1646 = vmatprep.subr.mxu0 %v1270
    %1647 = vmatpush2.msra.mxu0 %v1269
    %1648 = vmatprep.mubr.f32.mxu0 %v866
    %1649 = vmatmul.mubr.f32.gmra.mxu0 %v865
    %v1650 = vpop.f32.mrf.mxu0
    %v1651 = vadd.f32 %v1509, %v1650
    %v1652 = vpop.f32.mrf.mxu0
    %v1653 = vadd.f32 %v1511, %v1652
    %1654 = vdwg.mxu0
    %1655 = vmatprep.subr.mxu0 %v1268
    %1656 = vmatpush1.msra.mxu0 %v1267
    %1657 = vmatprep.subr.mxu0 %v1264
    %1658 = vmatpush1.msra.mxu0 %v1263
    %1659 = vmatprep.subr.mxu0 %v1260
    %1660 = vmatpush1.msra.mxu0 %v1259
    %1661 = vmatprep.subr.mxu0 %v1256
    %1662 = vmatpush1.msra.mxu0 %v1255
    %1663 = vmatprep.subr.mxu0 %v1252
    %1664 = vmatpush1.msra.mxu0 %v1251
    %1665 = vmatprep.subr.mxu0 %v1248
    %1666 = vmatpush1.msra.mxu0 %v1247
    %1667 = vmatprep.subr.mxu0 %v1244
    %1668 = vmatpush1.msra.mxu0 %v1243
    %1669 = vmatprep.subr.mxu0 %v1240
    %1670 = vmatpush1.msra.mxu0 %v1239
    %1671 = vmatprep.subr.mxu0 %v1236
    %1672 = vmatpush1.msra.mxu0 %v1235
    %1673 = vmatprep.subr.mxu0 %v1232
    %1674 = vmatpush1.msra.mxu0 %v1231
    %1675 = vmatprep.subr.mxu0 %v1228
    %1676 = vmatpush1.msra.mxu0 %v1227
    %1677 = vmatprep.subr.mxu0 %v1224
    %1678 = vmatpush1.msra.mxu0 %v1223
    %1679 = vmatprep.subr.mxu0 %v1220
    %1680 = vmatpush1.msra.mxu0 %v1219
    %1681 = vmatprep.subr.mxu0 %v1216
    %1682 = vmatpush1.msra.mxu0 %v1215
    %1683 = vmatprep.subr.mxu0 %v1212
    %1684 = vmatpush1.msra.mxu0 %v1211
    %1685 = vmatprep.subr.mxu0 %v1208
    %1686 = vmatpush1.msra.mxu0 %v1207
    %1687 = vmatprep.subr.mxu0 %v1332
    %1688 = vmatpush2.msra.mxu0 %v1331
    %1689 = vmatprep.subr.mxu0 %v1328
    %1690 = vmatpush2.msra.mxu0 %v1327
    %1691 = vmatprep.subr.mxu0 %v1324
    %1692 = vmatpush2.msra.mxu0 %v1323
    %1693 = vmatprep.subr.mxu0 %v1320
    %1694 = vmatpush2.msra.mxu0 %v1319
    %1695 = vmatprep.subr.mxu0 %v1316
    %1696 = vmatpush2.msra.mxu0 %v1315
    %1697 = vmatprep.subr.mxu0 %v1312
    %1698 = vmatpush2.msra.mxu0 %v1311
    %1699 = vmatprep.subr.mxu0 %v1308
    %1700 = vmatpush2.msra.mxu0 %v1307
    %1701 = vmatprep.subr.mxu0 %v1304
    %1702 = vmatpush2.msra.mxu0 %v1303
    %1703 = vmatprep.subr.mxu0 %v1300
    %1704 = vmatpush2.msra.mxu0 %v1299
    %1705 = vmatprep.subr.mxu0 %v1296
    %1706 = vmatpush2.msra.mxu0 %v1295
    %1707 = vmatprep.subr.mxu0 %v1292
    %1708 = vmatpush2.msra.mxu0 %v1291
    %1709 = vmatprep.subr.mxu0 %v1288
    %1710 = vmatpush2.msra.mxu0 %v1287
    %1711 = vmatprep.subr.mxu0 %v1284
    %1712 = vmatpush2.msra.mxu0 %v1283
    %1713 = vmatprep.subr.mxu0 %v1280
    %1714 = vmatpush2.msra.mxu0 %v1279
    %1715 = vmatprep.subr.mxu0 %v1276
    %1716 = vmatpush2.msra.mxu0 %v1275
    %1717 = vmatprep.subr.mxu0 %v1272
    %1718 = vmatpush2.msra.mxu0 %v1271
    %1719 = vmatprep.mubr.f32.mxu0 %v866
    %1720 = vmatmul.mubr.f32.gmra.mxu0 %v865
    %v1721 = vpop.f32.mrf.mxu0
    %v1722 = vadd.f32 %v1580, %v1721
    %v1723 = vpop.f32.mrf.mxu0
    %v1724 = vadd.f32 %v1582, %v1723
    %1725 = vdwg.mxu0
    %v1726 = vmax.f32 %v1651, %v1722
    %v1727 = vmax.f32 %v1653, %v1724
    %v1728 = vld [vmem:[%s7] sm:$0xff]
    %v1729 = vld [vmem:[%s7 + $0x8] sm:$0xff]
    %v1730 = vld [vmem:[%s7 + $0x10] sm:$0xff]
    %v1731 = vld [vmem:[%s7 + $0x18] sm:$0xff]
    %v1732 = vld [vmem:[%s7 + $0x20] sm:$0xff]
    %v1733 = vld [vmem:[%s7 + $0x28] sm:$0xff]
    %v1734 = vld [vmem:[%s7 + $0x30] sm:$0xff]
    %v1735 = vld [vmem:[%s7 + $0x38] sm:$0xff]
    %v1736 = vld [vmem:[%s7 + $0x40] sm:$0xff]
    %v1737 = vld [vmem:[%s7 + $0x48] sm:$0xff]
    %v1738 = vld [vmem:[%s7 + $0x50] sm:$0xff]
    %v1739 = vld [vmem:[%s7 + $0x58] sm:$0xff]
    %v1740 = vld [vmem:[%s7 + $0x60] sm:$0xff]
    %v1741 = vld [vmem:[%s7 + $0x68] sm:$0xff]
    %v1742 = vld [vmem:[%s7 + $0x70] sm:$0xff]
    %v1743 = vld [vmem:[%s7 + $0x78] sm:$0xff]
    %v1744 = vld [vmem:[%s7 + $0x80] sm:$0xff]
    %v1745 = vld [vmem:[%s7 + $0x88] sm:$0xff]
    %v1746 = vld [vmem:[%s7 + $0x90] sm:$0xff]
    %v1747 = vld [vmem:[%s7 + $0x98] sm:$0xff]
    %v1748 = vld [vmem:[%s7 + $0xa0] sm:$0xff]
    %v1749 = vld [vmem:[%s7 + $0xa8] sm:$0xff]
    %v1750 = vld [vmem:[%s7 + $0xb0] sm:$0xff]
    %v1751 = vld [vmem:[%s7 + $0xb8] sm:$0xff]
    %v1752 = vld [vmem:[%s7 + $0xc0] sm:$0xff]
    %v1753 = vld [vmem:[%s7 + $0xc8] sm:$0xff]
    %v1754 = vld [vmem:[%s7 + $0xd0] sm:$0xff]
    %v1755 = vld [vmem:[%s7 + $0xd8] sm:$0xff]
    %v1756 = vld [vmem:[%s7 + $0xe0] sm:$0xff]
    %v1757 = vld [vmem:[%s7 + $0xe8] sm:$0xff]
    %v1758 = vld [vmem:[%s7 + $0xf0] sm:$0xff]
    %v1759 = vld [vmem:[%s7 + $0xf8] sm:$0xff]
    %v1760 = vld [vmem:[%s8] sm:$0x1]
    %v1762 = vlaneseq
    %v1763 = vshrl.u32 %v1762, 7
    %v1764 = vsub.s32 0, %v1763
    %v1765 = vrot.slane %v1760, %v1764
    %1767 = vmatprep.subr.mxu0 0.0
    %1768 = vmatpush1.msra.mxu0 %v1743
    %1769 = vmatprep.subr.mxu0 0.0
    %1770 = vmatpush1.msra.mxu0 %v1742
    %1771 = vmatprep.subr.mxu0 0.0
    %1772 = vmatpush1.msra.mxu0 %v1741
    %1773 = vmatprep.subr.mxu0 0.0
    %1774 = vmatpush1.msra.mxu0 %v1740
    %1775 = vmatprep.subr.mxu0 0.0
    %1776 = vmatpush1.msra.mxu0 %v1739
    %1777 = vmatprep.subr.mxu0 0.0
    %1778 = vmatpush1.msra.mxu0 %v1738
    %1779 = vmatprep.subr.mxu0 0.0
    %1780 = vmatpush1.msra.mxu0 %v1737
    %1781 = vmatprep.subr.mxu0 0.0
    %1782 = vmatpush1.msra.mxu0 %v1736
    %1783 = vmatprep.subr.mxu0 0.0
    %1784 = vmatpush1.msra.mxu0 %v1735
    %1785 = vmatprep.subr.mxu0 0.0
    %1786 = vmatpush1.msra.mxu0 %v1734
    %1787 = vmatprep.subr.mxu0 0.0
    %1788 = vmatpush1.msra.mxu0 %v1733
    %1789 = vmatprep.subr.mxu0 0.0
    %1790 = vmatpush1.msra.mxu0 %v1732
    %1791 = vmatprep.subr.mxu0 0.0
    %1792 = vmatpush1.msra.mxu0 %v1731
    %1793 = vmatprep.subr.mxu0 0.0
    %1794 = vmatpush1.msra.mxu0 %v1730
    %1795 = vmatprep.subr.mxu0 0.0
    %1796 = vmatpush1.msra.mxu0 %v1729
    %1797 = vmatprep.subr.mxu0 0.0
    %1798 = vmatpush1.msra.mxu0 %v1728
    %1799 = vmatprep.subr.mxu0 0.0
    %1800 = vmatpush2.msra.mxu0 %v1759
    %1801 = vmatprep.subr.mxu0 0.0
    %1802 = vmatpush2.msra.mxu0 %v1758
    %1803 = vmatprep.subr.mxu0 0.0
    %1804 = vmatpush2.msra.mxu0 %v1757
    %1805 = vmatprep.subr.mxu0 0.0
    %1806 = vmatpush2.msra.mxu0 %v1756
    %1807 = vmatprep.subr.mxu0 0.0
    %1808 = vmatpush2.msra.mxu0 %v1755
    %1809 = vmatprep.subr.mxu0 0.0
    %1810 = vmatpush2.msra.mxu0 %v1754
    %1811 = vmatprep.subr.mxu0 0.0
    %1812 = vmatpush2.msra.mxu0 %v1753
    %1813 = vmatprep.subr.mxu0 0.0
    %1814 = vmatpush2.msra.mxu0 %v1752
    %1815 = vmatprep.subr.mxu0 0.0
    %1816 = vmatpush2.msra.mxu0 %v1751
    %1817 = vmatprep.subr.mxu0 0.0
    %1818 = vmatpush2.msra.mxu0 %v1750
    %1819 = vmatprep.subr.mxu0 0.0
    %1820 = vmatpush2.msra.mxu0 %v1749
    %1821 = vmatprep.subr.mxu0 0.0
    %1822 = vmatpush2.msra.mxu0 %v1748
    %1823 = vmatprep.subr.mxu0 0.0
    %1824 = vmatpush2.msra.mxu0 %v1747
    %1825 = vmatprep.subr.mxu0 0.0
    %1826 = vmatpush2.msra.mxu0 %v1746
    %1827 = vmatprep.subr.mxu0 0.0
    %1828 = vmatpush2.msra.mxu0 %v1745
    %1829 = vmatprep.subr.mxu0 0.0
    %1830 = vmatpush2.msra.mxu0 %v1744
    %1831 = vmatprep.mubr.f32.mxu0 %v1727
    %1832 = vmatmul.mubr.f32.gmra.mxu0 %v1726
    %v1833 = vpop.f32.mrf.mxu0
    %v1834 = vadd.f32 %v1765, %v1833
    %v1835 = vpop.f32.mrf.mxu0
    %1836 = vdwg.mxu0
    %v1837 = vmax.f32 %v1834, 0.0
    %v1838 = vld [vmem:[%s9] sm:$0xf]
    %v1839 = vld [vmem:[%s9 + $0x4] sm:$0xf]
    %v1840 = vld [vmem:[%s9 + $0x8] sm:$0xf]
    %v1841 = vld [vmem:[%s9 + $0xc] sm:$0xf]
    %v1842 = vld [vmem:[%s9 + $0x10] sm:$0xf]
    %v1843 = vld [vmem:[%s9 + $0x14] sm:$0xf]
    %v1844 = vld [vmem:[%s9 + $0x18] sm:$0xf]
    %v1845 = vld [vmem:[%s9 + $0x1c] sm:$0xf]
    %v1846 = vld [vmem:[%s10] sm:$0x1]
    %v1848 = vlaneseq
    %v1849 = vshrl.u32 %v1848, 7
    %v1850 = vsub.s32 0, %v1849
    %v1851 = vrot.slane %v1846, %v1850
    %v1861 = vunpack.c.l.b16 %v1838
    %v1862 = vunpack.c.l.b16 %v1839
    %v1863 = vunpack.c.l.b16 %v1840
    %v1864 = vunpack.c.l.b16 %v1841
    %v1865 = vunpack.c.l.b16 %v1842
    %v1866 = vunpack.c.l.b16 %v1843
    %v1867 = vunpack.c.l.b16 %v1844
    %v1868 = vunpack.c.l.b16 %v1845
    %v1869 = vpack.c.b16 %v1862, %v1861
    %v1870 = vpack.c.b16 %v1864, %v1863
    %v1871 = vpack.c.b16 %v1866, %v1865
    %v1872 = vpack.c.b16 %v1868, %v1867
    %v1878 = vsel %vm582, %v1837, 0
    %1880 = vmatprep.subr.bf16.mxu0 0
    %1881 = vmatpush1.bf16.msra.mxu0 0
    %1882 = vmatprep.subr.bf16.mxu0 0
    %1883 = vmatpush1.bf16.msra.mxu0 0
    %1884 = vmatprep.subr.bf16.mxu0 0
    %1885 = vmatpush1.bf16.msra.mxu0 0
    %1886 = vmatprep.subr.bf16.mxu0 0
    %1887 = vmatpush1.bf16.msra.mxu0 0
    %1888 = vmatprep.subr.bf16.mxu0 0
    %1889 = vmatpush1.bf16.msra.mxu0 %v1872
    %1890 = vmatprep.subr.bf16.mxu0 0
    %1891 = vmatpush1.bf16.msra.mxu0 %v1871
    %1892 = vmatprep.subr.bf16.mxu0 0
    %1893 = vmatpush1.bf16.msra.mxu0 %v1870
    %1894 = vmatprep.subr.bf16.mxu0 0
    %1895 = vmatpush1.bf16.msra.mxu0 %v1869
    %1896 = vmatprep.subr.bf16.mxu0 0
    %1897 = vmatpush2.bf16.msra.mxu0 0
    %1898 = vmatprep.subr.bf16.mxu0 0
    %1899 = vmatpush2.bf16.msra.mxu0 0
    %1900 = vmatprep.subr.bf16.mxu0 0
    %1901 = vmatpush2.bf16.msra.mxu0 0
    %1902 = vmatprep.subr.bf16.mxu0 0
    %1903 = vmatpush2.bf16.msra.mxu0 0
    %1904 = vmatprep.subr.bf16.mxu0 0
    %1905 = vmatpush2.bf16.msra.mxu0 0
    %1906 = vmatprep.subr.bf16.mxu0 0
    %1907 = vmatpush2.bf16.msra.mxu0 0
    %1908 = vmatprep.subr.bf16.mxu0 0
    %1909 = vmatpush2.bf16.msra.mxu0 0
    %1910 = vmatprep.subr.bf16.mxu0 0
    %1911 = vmatpush2.bf16.msra.mxu0 0
    %1912 = vmatprep.mubr.f32.mxu0 0.0
    %1913 = vmatmul.mubr.f32.gmra.mxu0 %v1878
    %v1914 = vpop.f32.mrf.mxu0
    %v1915 = vadd.f32 %v1851, %v1914
    %v1916 = vpop.f32.mrf.mxu0
    %1917 = vdwg.mxu0
    %1918 = vst [vmem:[#allocation2] sm:$0x3] %v1915
    // Predicated region
    $region46: #{group_activity_forward.1} parent=1 // pred_check
      _
    $region47: #{group_activity_forward.1} parent=1 // pred_check_branch
      %1920 = sbr.rel (0) target = $region49
    $region48: #{group_activity_forward.1} parent=1 // pred_region
      %s1922 = ssub.s32 32, 32
      %1923 = vsyncadd [#allocation3], %s1922
      %s1925 = sshll.u32 [#allocation2], 4
      %s1926 = int_to_ptr.vmem [resolvable:$true] %s1925
      %1928 = dma.vmem_to_hbm [thread:$0]  %s1926, 32, %s11, [#allocation3]
    $region49: #{group_activity_forward.1} parent=1 // pred_fallthru
      _
    // Predicated region
    $region50: #{group_activity_forward.1} parent=1 // pred_check
      _
    $region51: #{group_activity_forward.1} parent=1 // pred_check_branch
      %1930 = sbr.rel (0) target = $region53
    $region52: #{group_activity_forward.1} parent=1 // pred_region
      %1931 = dma.done [#allocation3], 32
    $region53: #{group_activity_forward.1} parent=1 // pred_fallthru
      _
    %1932 = vsyncpa [#allocation3], 1

</llo_original>
